<compile_context>
chip_gen: v7x
topology: tpu7x:2x2x1
jax: 0.10.0
libtpu: 0.0.40
codegen_flags: <defaults>
</compile_context>

<pallas_src>
import functools

import jax
import jax.numpy as jnp
from jax.experimental import pallas as pl
from jax.experimental.pallas import tpu as pltpu


# ----------------------------------------------------------------------------
# Model constants
# ----------------------------------------------------------------------------
CLIP_DIM = 768              # hard-coded in the PyTorch module
EMBED_DIM = 256             # "embed_dim" (small synthetic choice, default 1024)
NUM_CLASSES = 16
NUM_CLASSES_PAD = 128       # lane-dense padded classifier width
PATCH = 8                   # synthetic CLIP patch size
PATCH_DIM = 3 * PATCH * PATCH        # 192
PATCH_DIM_PAD = 256                  # pad K to a full MXU width
BN_EPS = 1e-5


# ----------------------------------------------------------------------------
# Kernel 1: fused surrogate-CLIP patch embedding + mean pool
#   tokens = patches @ W  (bf16 in, f32 acc)
#   feats  = mean_patches(tokens) + b
# grid = (image, patch_tile); patch axis is an "arbitrary" reduction with a
# resident (1, 768) f32 accumulator; image axis is "parallel" (megacore).
# ----------------------------------------------------------------------------
def _embed_pool_kernel(p_ref, w_ref, b_ref, o_ref, acc_ref, *,
                       num_patches, tile_p):
    k = pl.program_id(1)

    @pl.when(k == 0)
    def _():
        acc_ref[...] = jnp.zeros_like(acc_ref)

    # (tile_p, pd) @ (pd, 768) -> (tile_p, 768), f32 accumulation on the MXU.
    y = jnp.dot(p_ref[0], w_ref[...], preferred_element_type=jnp.float32)

    if num_patches % tile_p != 0:
        # Ragged last tile: mask out-of-range rows before the reduction.
        valid = num_patches - k * tile_p
        row = jax.lax.broadcasted_iota(jnp.int32, y.shape, 0)
        y = jnp.where(row < valid, y, 0.0)

    acc_ref[...] += jnp.sum(y, axis=0, keepdims=True)

    @pl.when(k == pl.num_programs(1) - 1)
    def _():
        # mean over patches; bias is added once (mean of a constant = constant).
        o_ref[0] = acc_ref[...] * (1.0 / num_patches) + b_ref[...]


def clip_patch_embed_pool(patches, clip_w, clip_b):
    """patches: (B, P, pd) bf16, clip_w: (pd, 768) bf16, clip_b: (1, 768) f32."""
    b, p, pd = patches.shape
    tile_p = p if p <= 512 else 512           # <=512 rows keeps VMEM small (v7x)
    grid = (b, pl.cdiv(p, tile_p))
    kernel = functools.partial(_embed_pool_kernel, num_patches=p, tile_p=tile_p)

    flops = 2 * b * p * pd * CLIP_DIM
    bytes_accessed = int(patches.size * patches.dtype.itemsize
                         + clip_w.size * clip_w.dtype.itemsize
                         + clip_b.size * 4
                         + b * CLIP_DIM * 4)

    out = pl.pallas_call(
        kernel,
        out_shape=jax.ShapeDtypeStruct((b, 1, CLIP_DIM), jnp.float32),
        grid=grid,
        in_specs=[
            pl.BlockSpec((1, tile_p, pd), lambda i, k: (i, k, 0)),
            pl.BlockSpec((pd, CLIP_DIM), lambda i, k: (0, 0)),
            pl.BlockSpec((1, CLIP_DIM), lambda i, k: (0, 0)),
        ],
        out_specs=pl.BlockSpec((1, 1, CLIP_DIM), lambda i, k: (i, 0, 0)),
        scratch_shapes=[pltpu.VMEM((1, CLIP_DIM), jnp.float32)],
        compiler_params=pltpu.CompilerParams(
            dimension_semantics=("parallel", "arbitrary")),
        cost_estimate=pl.CostEstimate(flops=flops, transcendentals=0,
                                      bytes_accessed=bytes_accessed),
    )(patches, clip_w, clip_b)
    return out.reshape(b, CLIP_DIM)


# ----------------------------------------------------------------------------
# Kernel 2: fused projection head + classifier (BN pre-folded, eval mode)
#   emb           = relu(feats @ W1' + b1')      (Dropout p=0.1 -> identity)
#   logits_padded = emb @ W2_pad + b2_pad        (lane-dense, 128 wide)
# grid = (batch_tile,), marked "parallel" for megacore on v7x.
# ----------------------------------------------------------------------------
def _head_kernel(f_ref, w1_ref, b1_ref, w2_ref, b2_ref, emb_ref, log_ref):
    h = (jnp.dot(f_ref[...], w1_ref[...], preferred_element_type=jnp.float32)
         + b1_ref[...])
    emb = jnp.maximum(h, 0.0)
    emb_ref[...] = emb
    log_ref[...] = (jnp.dot(emb.astype(jnp.bfloat16), w2_ref[...],
                            preferred_element_type=jnp.float32)
                    + b2_ref[...])


def projection_head(feats, w1, b1, w2, b2):
    """feats: (B, 768) bf16; w1: (768, E) bf16; b1: (1, E) f32;
       w2: (E, 128) bf16; b2: (1, 128) f32."""
    bsz = feats.shape[0]
    e = w1.shape[1]
    cpad = w2.shape[1]
    tile_b = bsz if bsz <= 256 else 256
    grid = (pl.cdiv(bsz, tile_b),)

    return pl.pallas_call(
        _head_kernel,
        out_shape=(jax.ShapeDtypeStruct((bsz, e), jnp.float32),
                   jax.ShapeDtypeStruct((bsz, cpad), jnp.float32)),
        grid=grid,
        in_specs=[
            pl.BlockSpec((tile_b, CLIP_DIM), lambda i: (i, 0)),   # feats
            pl.BlockSpec((CLIP_DIM, e), lambda i: (0, 0)),        # W1 (BN folded)
            pl.BlockSpec((1, e), lambda i: (0, 0)),               # b1 (BN folded)
            pl.BlockSpec((e, cpad), lambda i: (0, 0)),            # W2 (padded)
            pl.BlockSpec((1, cpad), lambda i: (0, 0)),            # b2 (padded)
        ],
        out_specs=(pl.BlockSpec((tile_b, e), lambda i: (i, 0)),
                   pl.BlockSpec((tile_b, cpad), lambda i: (i, 0))),
        compiler_params=pltpu.CompilerParams(
            dimension_semantics=("parallel",)),
    )(feats, w1, b1, w2, b2)


# ----------------------------------------------------------------------------
# Parameters (frozen synthetic CLIP + projection + classifier)
# ----------------------------------------------------------------------------
def init_params(key):
    ks = jax.random.split(key, 6)
    clip_w = (jax.random.normal(ks[0], (PATCH_DIM, CLIP_DIM), jnp.float32)
              * (1.0 / jnp.sqrt(PATCH_DIM)))
    # zero-pad K rows 192 -> 256 so padded patch columns contribute nothing
    clip_w = jnp.pad(clip_w, ((0, PATCH_DIM_PAD - PATCH_DIM), (0, 0)))
    params = {
        # frozen synthetic CLIP patch-embed weights
        "clip_w": clip_w,                                               # (256, 768)
        "clip_b": jax.random.normal(ks[1], (1, CLIP_DIM), jnp.float32) * 0.02,
        # projection: Linear(768, embed_dim)
        "w1": jax.random.normal(ks[2], (CLIP_DIM, EMBED_DIM), jnp.float32)
        * (1.0 / jnp.sqrt(CLIP_DIM)),
        "b1": jax.random.normal(ks[3], (1, EMBED_DIM), jnp.float32) * 0.02,
        # BatchNorm1d(embed_dim) — PyTorch default init (eval-mode running stats)
        "gamma": jnp.ones((1, EMBED_DIM), jnp.float32),
        "beta": jnp.zeros((1, EMBED_DIM), jnp.float32),
        "running_mean": jnp.zeros((1, EMBED_DIM), jnp.float32),
        "running_var": jnp.ones((1, EMBED_DIM), jnp.float32),
        # classifier: Linear(embed_dim, num_classes)
        "w2": jax.random.normal(ks[4], (EMBED_DIM, NUM_CLASSES), jnp.float32)
        * (1.0 / jnp.sqrt(EMBED_DIM)),
        "b2": jax.random.normal(ks[5], (1, NUM_CLASSES), jnp.float32) * 0.02,
    }
    return params


# ----------------------------------------------------------------------------
# Forward (glue in plain JAX)
# ----------------------------------------------------------------------------
def clip_encode_image(x_nchw, params):
    """Synthetic frozen CLIP encoder: patchify -> linear embed -> mean pool,
    with the embed+pool fused in a single Pallas kernel."""
    b, c, h, w = x_nchw.shape
    gh, gw = h // PATCH, w // PATCH
    patches = x_nchw.reshape(b, c, gh, PATCH, gw, PATCH)
    patches = patches.transpose(0, 2, 4, 1, 3, 5).reshape(
        b, gh * gw, c * PATCH * PATCH)
    # zero-pad patch_dim 192 -> 256 to present a full MXU contraction width
    patches = jnp.pad(patches, ((0, 0), (0, 0),
                                (0, PATCH_DIM_PAD - c * PATCH * PATCH)))
    return clip_patch_embed_pool(patches.astype(jnp.bfloat16),
                                 params["clip_w"].astype(jnp.bfloat16),
                                 params["clip_b"])          # (B, 768) f32


def clip_baseline_forward(x_nchw, params):
    """Mirrors CLIPBaseline.forward: returns (embeddings, logits)."""
    features = clip_encode_image(x_nchw, params)             # frozen backbone

    # Fold eval-mode BatchNorm into the projection Linear:
    #   W1' = W1 * s,  b1' = (b1 - running_mean) * s + beta,
    #   s = gamma * rsqrt(running_var + eps)
    s = params["gamma"] * jax.lax.rsqrt(params["running_var"] + BN_EPS)   # (1, E)
    w1_eff = params["w1"] * s
    b1_eff = (params["b1"] - params["running_mean"]) * s + params["beta"]

    # Lane-dense classifier output: zero-pad num_classes 16 -> 128.
    w2_pad = jnp.pad(params["w2"], ((0, 0), (0, NUM_CLASSES_PAD - NUM_CLASSES)))
    b2_pad = jnp.pad(params["b2"], ((0, 0), (0, NUM_CLASSES_PAD - NUM_CLASSES)))

    emb, logits_pad = projection_head(
        features.astype(jnp.bfloat16),
        w1_eff.astype(jnp.bfloat16), b1_eff,
        w2_pad.astype(jnp.bfloat16), b2_pad,
    )
    return emb, logits_pad[:, :NUM_CLASSES]


if __name__ == "__main__":
    key = jax.random.PRNGKey(0)
    pkey, xkey = jax.random.split(key)
    params = init_params(pkey)

    # small image batch, NCHW like PyTorch
    x = jax.random.normal(xkey, (2, 3, 16, 16), jnp.float32)

    fwd = jax.jit(clip_baseline_forward)
    emb, logits = fwd(x, params)
    jax.block_until_ready((emb, logits))

    assert emb.shape == (2, EMBED_DIM)
    assert logits.shape == (2, NUM_CLASSES)
    assert bool(jnp.all(emb >= 0.0))              # ReLU output
    assert bool(jnp.all(jnp.isfinite(emb)))
    assert bool(jnp.all(jnp.isfinite(logits)))
    print("KERNEL_OK")
</pallas_src>

<mosaic_0001>
module attributes {stable_mosaic.version = 11 : i64} {
  func.func @_embed_pool_kernel(%arg0: i32, %arg1: i32, %arg2: memref<1x4x256xbf16, #tpu.memory_space<vmem>>, %arg3: memref<256x768xbf16, #tpu.memory_space<vmem>>, %arg4: memref<1x768xf32, #tpu.memory_space<vmem>>, %arg5: memref<1x1x768xf32, #tpu.memory_space<vmem>>, %arg6: memref<1x768xf32, #tpu.memory_space<vmem>>) attributes {dimension_semantics = [#tpu.dimension_semantics<parallel>, #tpu.dimension_semantics<arbitrary>], iteration_bounds = array<i64: 2, 1>, scalar_prefetch = 0 : i64, scratch_operands = 1 : i64, tpu.core_type = #tpu.core_type<tc>, window_params = [{transform_indices = @transform_0, window_bounds = array<i64: 1, 4, 256>}, {pipeline_mode = #tpu.pipeline_mode<synchronous>, transform_indices = @transform_1, window_bounds = array<i64: 256, 768>}, {pipeline_mode = #tpu.pipeline_mode<synchronous>, transform_indices = @transform_2, window_bounds = array<i64: 1, 768>}, {transform_indices = @transform_3, window_bounds = array<i64: 1, 1, 768>}]} {
    %c0_i32 = arith.constant 0 : i32
    %0 = arith.cmpi eq, %arg1, %c0_i32 : i32
    %1 = arith.extui %0 : i1 to i32
    %c0_i32_0 = arith.constant 0 : i32
    %2 = arith.cmpi ne, %1, %c0_i32_0 : i32
    scf.if %2 {
      %cst_12 = arith.constant 0.000000e+00 : f32
      %15 = vector.broadcast %cst_12 : f32 to vector<1x768xf32>
      %c0_13 = arith.constant 0 : index
      %c0_14 = arith.constant 0 : index
      %16 = vector.load %arg6[%c0_13, %c0_14] : memref<1x768xf32, #tpu.memory_space<vmem>>, vector<1x768xf32>
      tpu.vector_store %arg6[%c0_13, %c0_14], %15 {strides = array<i32>} : memref<1x768xf32, #tpu.memory_space<vmem>>, vector<1x768xf32>,
    } else {
    }
    %c0 = arith.constant 0 : index
    %c0_1 = arith.constant 0 : index
    %c0_2 = arith.constant 0 : index
    %3 = vector.load %arg2[%c0, %c0_1, %c0_2] : memref<1x4x256xbf16, #tpu.memory_space<vmem>>, vector<1x4x256xbf16>
    %4 = vector.shape_cast %3 : vector<1x4x256xbf16> to vector<4x256xbf16>
    %c0_3 = arith.constant 0 : index
    %c0_4 = arith.constant 0 : index
    %5 = vector.load %arg3[%c0_3, %c0_4] : memref<256x768xbf16, #tpu.memory_space<vmem>>, vector<256x768xbf16>
    %cst = arith.constant dense<0.000000e+00> : vector<4x768xf32>
    %6 = tpu.matmul %4, %5, %cst {dimension_numbers = #tpu.dot_dimension_numbers<[1], [0], [0], [1], [0, 0, 1, 1], [], []>} : vector<4x256xbf16>, vector<256x768xbf16>, vector<4x768xf32> -> vector<4x768xf32>
    %c0_5 = arith.constant 0 : index
    %c0_6 = arith.constant 0 : index
    %7 = vector.load %arg6[%c0_5, %c0_6] : memref<1x768xf32, #tpu.memory_space<vmem>>, vector<1x768xf32>
    %cst_7 = arith.constant dense<0.000000e+00> : vector<768xf32>
    %8 = vector.multi_reduction <add>, %6, %cst_7 [0] : vector<4x768xf32> to vector<768xf32>
    %9 = vector.shape_cast %8 : vector<768xf32> to vector<1x768xf32>
    %10 = arith.addf %7, %9 : vector<1x768xf32>
    %c0_8 = arith.constant 0 : index
    %c0_9 = arith.constant 0 : index
    %11 = vector.load %arg6[%c0_8, %c0_9] : memref<1x768xf32, #tpu.memory_space<vmem>>, vector<1x768xf32>
    tpu.vector_store %arg6[%c0_8, %c0_9], %10 {strides = array<i32>} : memref<1x768xf32, #tpu.memory_space<vmem>>, vector<1x768xf32>,
    %c0_i32_10 = arith.constant 0 : i32
    %12 = arith.cmpi eq, %arg1, %c0_i32_10 : i32
    %13 = arith.extui %12 : i1 to i32
    %c0_i32_11 = arith.constant 0 : i32
    %14 = arith.cmpi ne, %13, %c0_i32_11 : i32
    scf.if %14 {
      %c0_12 = arith.constant 0 : index
      %c0_13 = arith.constant 0 : index
      %15 = vector.load %arg6[%c0_12, %c0_13] : memref<1x768xf32, #tpu.memory_space<vmem>>, vector<1x768xf32>
      %cst_14 = arith.constant 2.500000e-01 : f32
      %16 = vector.broadcast %cst_14 : f32 to vector<1x768xf32>
      %17 = arith.mulf %15, %16 : vector<1x768xf32>
      %c0_15 = arith.constant 0 : index
      %c0_16 = arith.constant 0 : index
      %18 = vector.load %arg4[%c0_15, %c0_16] : memref<1x768xf32, #tpu.memory_space<vmem>>, vector<1x768xf32>
      %19 = arith.addf %17, %18 : vector<1x768xf32>
      %c0_17 = arith.constant 0 : index
      %c0_18 = arith.constant 0 : index
      %c0_19 = arith.constant 0 : index
      %20 = vector.load %arg5[%c0_17, %c0_18, %c0_19] : memref<1x1x768xf32, #tpu.memory_space<vmem>>, vector<1x1x768xf32>
      %21 = vector.shape_cast %20 : vector<1x1x768xf32> to vector<1x768xf32>
      %22 = vector.shape_cast %19 : vector<1x768xf32> to vector<1x1x768xf32>
      tpu.vector_store %arg5[%c0_17, %c0_18, %c0_19], %22 {strides = array<i32>} : memref<1x1x768xf32, #tpu.memory_space<vmem>>, vector<1x1x768xf32>,
    } else {
    }
    return
  }
  func.func @transform_0(%arg0: i32, %arg1: i32) -> (i32, i32, i32) {
    %c0_i32 = arith.constant 0 : i32
    %c0_i32_0 = arith.constant 0 : i32
    return %arg0, %arg1, %c0_i32 : i32, i32, i32
  }
  func.func @transform_1(%arg0: i32, %arg1: i32) -> (i32, i32) {
    %c0_i32 = arith.constant 0 : i32
    %c0_i32_0 = arith.constant 0 : i32
    %c0_i32_1 = arith.constant 0 : i32
    return %c0_i32, %c0_i32_0 : i32, i32
  }
  func.func @transform_2(%arg0: i32, %arg1: i32) -> (i32, i32) {
    %c0_i32 = arith.constant 0 : i32
    %c0_i32_0 = arith.constant 0 : i32
    %c0_i32_1 = arith.constant 0 : i32
    return %c0_i32, %c0_i32_0 : i32, i32
  }
  func.func @transform_3(%arg0: i32, %arg1: i32) -> (i32, i32, i32) {
    %c0_i32 = arith.constant 0 : i32
    %c0_i32_0 = arith.constant 0 : i32
    %c0_i32_1 = arith.constant 0 : i32
    return %arg0, %c0_i32, %c0_i32_0 : i32, i32, i32
  }
}

module attributes {stable_mosaic.version = 11 : i64} {
  func.func @_head_kernel(%arg0: i32, %arg1: memref<2x768xbf16, #tpu.memory_space<vmem>>, %arg2: memref<768x256xbf16, #tpu.memory_space<vmem>>, %arg3: memref<1x256xf32, #tpu.memory_space<vmem>>, %arg4: memref<256x128xbf16, #tpu.memory_space<vmem>>, %arg5: memref<1x128xf32, #tpu.memory_space<vmem>>, %arg6: memref<2x256xf32, #tpu.memory_space<vmem>>, %arg7: memref<2x128xf32, #tpu.memory_space<vmem>>) attributes {dimension_semantics = [#tpu.dimension_semantics<parallel>], iteration_bounds = array<i64: 1>, scalar_prefetch = 0 : i64, scratch_operands = 0 : i64, tpu.core_type = #tpu.core_type<tc>, window_params = [{transform_indices = @transform_0, window_bounds = array<i64: 2, 768>}, {pipeline_mode = #tpu.pipeline_mode<synchronous>, transform_indices = @transform_1, window_bounds = array<i64: 768, 256>}, {pipeline_mode = #tpu.pipeline_mode<synchronous>, transform_indices = @transform_2, window_bounds = array<i64: 1, 256>}, {pipeline_mode = #tpu.pipeline_mode<synchronous>, transform_indices = @transform_3, window_bounds = array<i64: 256, 128>}, {pipeline_mode = #tpu.pipeline_mode<synchronous>, transform_indices = @transform_4, window_bounds = array<i64: 1, 128>}, {transform_indices = @transform_5, window_bounds = array<i64: 2, 256>}, {transform_indices = @transform_6, window_bounds = array<i64: 2, 128>}]} {
    %c0 = arith.constant 0 : index
    %c0_0 = arith.constant 0 : index
    %0 = vector.load %arg1[%c0, %c0_0] : memref<2x768xbf16, #tpu.memory_space<vmem>>, vector<2x768xbf16>
    %c0_1 = arith.constant 0 : index
    %c0_2 = arith.constant 0 : index
    %1 = vector.load %arg2[%c0_1, %c0_2] : memref<768x256xbf16, #tpu.memory_space<vmem>>, vector<768x256xbf16>
    %cst = arith.constant dense<0.000000e+00> : vector<2x256xf32>
    %2 = tpu.matmul %0, %1, %cst {dimension_numbers = #tpu.dot_dimension_numbers<[1], [0], [0], [1], [0, 0, 1, 1], [], []>} : vector<2x768xbf16>, vector<768x256xbf16>, vector<2x256xf32> -> vector<2x256xf32>
    %c0_3 = arith.constant 0 : index
    %c0_4 = arith.constant 0 : index
    %3 = vector.load %arg3[%c0_3, %c0_4] : memref<1x256xf32, #tpu.memory_space<vmem>>, vector<1x256xf32>
    %4 = vector.broadcast %3 : vector<1x256xf32> to vector<2x256xf32>
    %5 = arith.addf %2, %4 : vector<2x256xf32>
    %cst_5 = arith.constant 0.000000e+00 : f32
    %6 = vector.broadcast %cst_5 : f32 to vector<2x256xf32>
    %7 = arith.maximumf %5, %6 : vector<2x256xf32>
    %c0_6 = arith.constant 0 : index
    %c0_7 = arith.constant 0 : index
    %8 = vector.load %arg6[%c0_6, %c0_7] : memref<2x256xf32, #tpu.memory_space<vmem>>, vector<2x256xf32>
    tpu.vector_store %arg6[%c0_6, %c0_7], %7 {strides = array<i32>} : memref<2x256xf32, #tpu.memory_space<vmem>>, vector<2x256xf32>,
    %9 = arith.truncf %7 : vector<2x256xf32> to vector<2x256xbf16>
    %c0_8 = arith.constant 0 : index
    %c0_9 = arith.constant 0 : index
    %10 = vector.load %arg4[%c0_8, %c0_9] : memref<256x128xbf16, #tpu.memory_space<vmem>>, vector<256x128xbf16>
    %cst_10 = arith.constant dense<0.000000e+00> : vector<2x128xf32>
    %11 = tpu.matmul %9, %10, %cst_10 {dimension_numbers = #tpu.dot_dimension_numbers<[1], [0], [0], [1], [0, 0, 1, 1], [], []>} : vector<2x256xbf16>, vector<256x128xbf16>, vector<2x128xf32> -> vector<2x128xf32>
    %c0_11 = arith.constant 0 : index
    %c0_12 = arith.constant 0 : index
    %12 = vector.load %arg5[%c0_11, %c0_12] : memref<1x128xf32, #tpu.memory_space<vmem>>, vector<1x128xf32>
    %13 = vector.broadcast %12 : vector<1x128xf32> to vector<2x128xf32>
    %14 = arith.addf %11, %13 : vector<2x128xf32>
    %c0_13 = arith.constant 0 : index
    %c0_14 = arith.constant 0 : index
    %15 = vector.load %arg7[%c0_13, %c0_14] : memref<2x128xf32, #tpu.memory_space<vmem>>, vector<2x128xf32>
    tpu.vector_store %arg7[%c0_13, %c0_14], %14 {strides = array<i32>} : memref<2x128xf32, #tpu.memory_space<vmem>>, vector<2x128xf32>,
    return
  }
  func.func @transform_0(%arg0: i32) -> (i32, i32) {
    %c0_i32 = arith.constant 0 : i32
    %c0_i32_0 = arith.constant 0 : i32
    return %arg0, %c0_i32 : i32, i32
  }
  func.func @transform_1(%arg0: i32) -> (i32, i32) {
    %c0_i32 = arith.constant 0 : i32
    %c0_i32_0 = arith.constant 0 : i32
    %c0_i32_1 = arith.constant 0 : i32
    return %c0_i32, %c0_i32_0 : i32, i32
  }
  func.func @transform_2(%arg0: i32) -> (i32, i32) {
    %c0_i32 = arith.constant 0 : i32
    %c0_i32_0 = arith.constant 0 : i32
    %c0_i32_1 = arith.constant 0 : i32
    return %c0_i32, %c0_i32_0 : i32, i32
  }
  func.func @transform_3(%arg0: i32) -> (i32, i32) {
    %c0_i32 = arith.constant 0 : i32
    %c0_i32_0 = arith.constant 0 : i32
    %c0_i32_1 = arith.constant 0 : i32
    return %c0_i32, %c0_i32_0 : i32, i32
  }
  func.func @transform_4(%arg0: i32) -> (i32, i32) {
    %c0_i32 = arith.constant 0 : i32
    %c0_i32_0 = arith.constant 0 : i32
    %c0_i32_1 = arith.constant 0 : i32
    return %c0_i32, %c0_i32_0 : i32, i32
  }
  func.func @transform_5(%arg0: i32) -> (i32, i32) {
    %c0_i32 = arith.constant 0 : i32
    %c0_i32_0 = arith.constant 0 : i32
    return %arg0, %c0_i32 : i32, i32
  }
  func.func @transform_6(%arg0: i32) -> (i32, i32) {
    %c0_i32 = arith.constant 0 : i32
    %c0_i32_0 = arith.constant 0 : i32
    return %arg0, %c0_i32 : i32, i32
  }
}

</mosaic_0001>

<llo_original>
// kernel: clip_baseline_forward.3
$region0: #{clip_baseline_forward.3}
  #allocation0 [shape = 'u32[]', space=smem, size = 0x4, offset = 0x4, fixed_abs, tag = 'smem constant byte address 0x4 - core index']
  #allocation1 [shape = 'u32[144,128]{1,0:T(1,128)}', space=vmem, size = 0x12000, scoped, tag = 'internal scratch']
  %s0 = inlined_call_operand.vmem [shape: bf16[2,768], index: 0, kind: input, shape index: {}]
  %s1 = inlined_call_operand.vmem [shape: bf16[768,256], index: 1, kind: input, shape index: {}]
  %s2 = inlined_call_operand.vmem [shape: f32[1,256], index: 2, kind: input, shape index: {}]
  %s3 = inlined_call_operand.vmem [shape: bf16[256,128], index: 3, kind: input, shape index: {}]
  %s4 = inlined_call_operand.vmem [shape: f32[1,128], index: 4, kind: input, shape index: {}]
  %s5 = inlined_call_operand.hbm [shape: f32[2,256], index: 5, kind: output, shape index: {0}]
  %s6 = inlined_call_operand.hbm [shape: f32[2,128], index: 6, kind: output, shape index: {1}]
  %7 = xla_tuple %s5, %s6
  %s8 = sld [smem:[#allocation0]]
  $region38: #{clip_baseline_forward.3} parent=0
    _
  %s10 = ssub.s32 1, %s8
  %s11 = scalar_select 0, %s10, %s8
  $region1: #{clip_baseline_forward.3} parent=0
    #allocation2 [shape = 'u8[2048]{0}', space=vmem, size = 0x800, scoped, tag = 'output window, operand 0, single buffered']
    #allocation3 [shape = 's32[1]{0}', space=sflag, size = 0x4, scoped, tag = 'scoped memory for clip_baseline_forward.3']
    #allocation4 [shape = 'u8[1024]{0}', space=vmem, size = 0x400, scoped, tag = 'output window, operand 1, single buffered']
    #allocation5 [shape = 's32[1]{0}', space=sflag, size = 0x4, scoped, tag = 'scoped memory for clip_baseline_forward.3']
    %12 = vsyncpa [#allocation3], 0
    %13 = vsyncpa [#allocation5], 0
    // Predicated region
    $region2: #{clip_baseline_forward.3} parent=1 // pred_check
      _
    $region3: #{clip_baseline_forward.3} parent=1 // pred_check_branch
      %15 = sbr.rel (0) target = $region5
    $region4: #{clip_baseline_forward.3} parent=1 // pred_region
      _
    $region5: #{clip_baseline_forward.3} parent=1 // pred_fallthru
      _
    // Predicated region
    $region6: #{clip_baseline_forward.3} parent=1 // pred_check
      _
    $region7: #{clip_baseline_forward.3} parent=1 // pred_check_branch
      %17 = sbr.rel (0) target = $region9
    $region8: #{clip_baseline_forward.3} parent=1 // pred_region
      _
    $region9: #{clip_baseline_forward.3} parent=1 // pred_fallthru
      _
    // Predicated region
    $region10: #{clip_baseline_forward.3} parent=1 // pred_check
      _
    $region11: #{clip_baseline_forward.3} parent=1 // pred_check_branch
      %19 = sbr.rel (0) target = $region13
    $region12: #{clip_baseline_forward.3} parent=1 // pred_region
      _
    $region13: #{clip_baseline_forward.3} parent=1 // pred_fallthru
      _
    // Predicated region
    $region14: #{clip_baseline_forward.3} parent=1 // pred_check
      _
    $region15: #{clip_baseline_forward.3} parent=1 // pred_check_branch
      %21 = sbr.rel (0) target = $region17
    $region16: #{clip_baseline_forward.3} parent=1 // pred_region
      _
    $region17: #{clip_baseline_forward.3} parent=1 // pred_fallthru
      _
    // Predicated region
    $region18: #{clip_baseline_forward.3} parent=1 // pred_check
      _
    $region19: #{clip_baseline_forward.3} parent=1 // pred_check_branch
      %23 = sbr.rel (0) target = $region21
    $region20: #{clip_baseline_forward.3} parent=1 // pred_region
      _
    $region21: #{clip_baseline_forward.3} parent=1 // pred_fallthru
      _
    %v25 = vld [vmem:[%s0] sm:$0x3f]
    %v26 = vld [vmem:[%s1] sm:$0xff]
    %v27 = vld [vmem:[%s1 + $0x8] sm:$0xff]
    %v28 = vld [vmem:[%s1 + $0x10] sm:$0xff]
    %v29 = vld [vmem:[%s1 + $0x18] sm:$0xff]
    %v30 = vld [vmem:[%s1 + $0x20] sm:$0xff]
    %v31 = vld [vmem:[%s1 + $0x28] sm:$0xff]
    %v32 = vld [vmem:[%s1 + $0x30] sm:$0xff]
    %v33 = vld [vmem:[%s1 + $0x38] sm:$0xff]
    %v34 = vld [vmem:[%s1 + $0x40] sm:$0xff]
    %v35 = vld [vmem:[%s1 + $0x48] sm:$0xff]
    %v36 = vld [vmem:[%s1 + $0x50] sm:$0xff]
    %v37 = vld [vmem:[%s1 + $0x58] sm:$0xff]
    %v38 = vld [vmem:[%s1 + $0x60] sm:$0xff]
    %v39 = vld [vmem:[%s1 + $0x68] sm:$0xff]
    %v40 = vld [vmem:[%s1 + $0x70] sm:$0xff]
    %v41 = vld [vmem:[%s1 + $0x78] sm:$0xff]
    %v42 = vld [vmem:[%s1 + $0x80] sm:$0xff]
    %v43 = vld [vmem:[%s1 + $0x88] sm:$0xff]
    %v44 = vld [vmem:[%s1 + $0x90] sm:$0xff]
    %v45 = vld [vmem:[%s1 + $0x98] sm:$0xff]
    %v46 = vld [vmem:[%s1 + $0xa0] sm:$0xff]
    %v47 = vld [vmem:[%s1 + $0xa8] sm:$0xff]
    %v48 = vld [vmem:[%s1 + $0xb0] sm:$0xff]
    %v49 = vld [vmem:[%s1 + $0xb8] sm:$0xff]
    %v50 = vld [vmem:[%s1 + $0xc0] sm:$0xff]
    %v51 = vld [vmem:[%s1 + $0xc8] sm:$0xff]
    %v52 = vld [vmem:[%s1 + $0xd0] sm:$0xff]
    %v53 = vld [vmem:[%s1 + $0xd8] sm:$0xff]
    %v54 = vld [vmem:[%s1 + $0xe0] sm:$0xff]
    %v55 = vld [vmem:[%s1 + $0xe8] sm:$0xff]
    %v56 = vld [vmem:[%s1 + $0xf0] sm:$0xff]
    %v57 = vld [vmem:[%s1 + $0xf8] sm:$0xff]
    %v58 = vld [vmem:[%s1 + $0x100] sm:$0xff]
    %v59 = vld [vmem:[%s1 + $0x108] sm:$0xff]
    %v60 = vld [vmem:[%s1 + $0x110] sm:$0xff]
    %v61 = vld [vmem:[%s1 + $0x118] sm:$0xff]
    %v62 = vld [vmem:[%s1 + $0x120] sm:$0xff]
    %v63 = vld [vmem:[%s1 + $0x128] sm:$0xff]
    %v64 = vld [vmem:[%s1 + $0x130] sm:$0xff]
    %v65 = vld [vmem:[%s1 + $0x138] sm:$0xff]
    %v66 = vld [vmem:[%s1 + $0x140] sm:$0xff]
    %v67 = vld [vmem:[%s1 + $0x148] sm:$0xff]
    %v68 = vld [vmem:[%s1 + $0x150] sm:$0xff]
    %v69 = vld [vmem:[%s1 + $0x158] sm:$0xff]
    %v70 = vld [vmem:[%s1 + $0x160] sm:$0xff]
    %v71 = vld [vmem:[%s1 + $0x168] sm:$0xff]
    %v72 = vld [vmem:[%s1 + $0x170] sm:$0xff]
    %v73 = vld [vmem:[%s1 + $0x178] sm:$0xff]
    %v74 = vld [vmem:[%s1 + $0x180] sm:$0xff]
    %v75 = vld [vmem:[%s1 + $0x188] sm:$0xff]
    %v76 = vld [vmem:[%s1 + $0x190] sm:$0xff]
    %v77 = vld [vmem:[%s1 + $0x198] sm:$0xff]
    %v78 = vld [vmem:[%s1 + $0x1a0] sm:$0xff]
    %v79 = vld [vmem:[%s1 + $0x1a8] sm:$0xff]
    %v80 = vld [vmem:[%s1 + $0x1b0] sm:$0xff]
    %v81 = vld [vmem:[%s1 + $0x1b8] sm:$0xff]
    %v82 = vld [vmem:[%s1 + $0x1c0] sm:$0xff]
    %v83 = vld [vmem:[%s1 + $0x1c8] sm:$0xff]
    %v84 = vld [vmem:[%s1 + $0x1d0] sm:$0xff]
    %v85 = vld [vmem:[%s1 + $0x1d8] sm:$0xff]
    %v86 = vld [vmem:[%s1 + $0x1e0] sm:$0xff]
    %v87 = vld [vmem:[%s1 + $0x1e8] sm:$0xff]
    %v88 = vld [vmem:[%s1 + $0x1f0] sm:$0xff]
    %v89 = vld [vmem:[%s1 + $0x1f8] sm:$0xff]
    %v90 = vld [vmem:[%s1 + $0x200] sm:$0xff]
    %v91 = vld [vmem:[%s1 + $0x208] sm:$0xff]
    %v92 = vld [vmem:[%s1 + $0x210] sm:$0xff]
    %v93 = vld [vmem:[%s1 + $0x218] sm:$0xff]
    %v94 = vld [vmem:[%s1 + $0x220] sm:$0xff]
    %v95 = vld [vmem:[%s1 + $0x228] sm:$0xff]
    %v96 = vld [vmem:[%s1 + $0x230] sm:$0xff]
    %v97 = vld [vmem:[%s1 + $0x238] sm:$0xff]
    %v98 = vld [vmem:[%s1 + $0x240] sm:$0xff]
    %v99 = vld [vmem:[%s1 + $0x248] sm:$0xff]
    %v100 = vld [vmem:[%s1 + $0x250] sm:$0xff]
    %v101 = vld [vmem:[%s1 + $0x258] sm:$0xff]
    %v102 = vld [vmem:[%s1 + $0x260] sm:$0xff]
    %v103 = vld [vmem:[%s1 + $0x268] sm:$0xff]
    %v104 = vld [vmem:[%s1 + $0x270] sm:$0xff]
    %v105 = vld [vmem:[%s1 + $0x278] sm:$0xff]
    %v106 = vld [vmem:[%s1 + $0x280] sm:$0xff]
    %v107 = vld [vmem:[%s1 + $0x288] sm:$0xff]
    %v108 = vld [vmem:[%s1 + $0x290] sm:$0xff]
    %v109 = vld [vmem:[%s1 + $0x298] sm:$0xff]
    %v110 = vld [vmem:[%s1 + $0x2a0] sm:$0xff]
    %v111 = vld [vmem:[%s1 + $0x2a8] sm:$0xff]
    %v112 = vld [vmem:[%s1 + $0x2b0] sm:$0xff]
    %v113 = vld [vmem:[%s1 + $0x2b8] sm:$0xff]
    %v114 = vld [vmem:[%s1 + $0x2c0] sm:$0xff]
    %v115 = vld [vmem:[%s1 + $0x2c8] sm:$0xff]
    %v116 = vld [vmem:[%s1 + $0x2d0] sm:$0xff]
    %v117 = vld [vmem:[%s1 + $0x2d8] sm:$0xff]
    %v118 = vld [vmem:[%s1 + $0x2e0] sm:$0xff]
    %v119 = vld [vmem:[%s1 + $0x2e8] sm:$0xff]
    %v120 = vld [vmem:[%s1 + $0x2f0] sm:$0xff]
    %v121 = vld [vmem:[%s1 + $0x2f8] sm:$0xff]
    %v122 = vld [vmem:[%s2] sm:$0x3]
    %v124 = vlaneseq
    %v125 = vshrl.u32 %v124, 7
    %v126 = vsub.s32 0, %v125
    %v127 = vrot.slane %v122, %v126
    %v128 = vlaneseq
    %v129 = vshrl.u32 %v128, 7
    %v130 = vsub.s32 1, %v129
    %v131 = vrot.slane %v122, %v130
    %v135 = vcombine.high %v25, %v25
    %v137 = vunpack.c.l.s4 1966171168
    %v138 = vunpack.c.0.s8 %v137
    %v139 = vlaneseq
    %v140 = vshrl.u32 %v139, 7
    %v141 = vsub.s32 %v138, %v140
    %v142 = vrot.slane %v25, %v141
    %v144 = vunpack.c.l.s4 1966171168
    %v145 = vunpack.c.0.s8 %v144
    %v146 = vlaneseq
    %v147 = vshrl.u32 %v146, 7
    %v148 = vsub.s32 %v145, %v147
    %v149 = vrot.slane %v135, %v148
    %v150 = vcombine.high %v142, %v142
    %v151 = vcombine.high %v149, %v149
    %v153 = vunpack.c.l.s4 1966171168
    %v154 = vunpack.c.0.s8 %v153
    %v155 = vlaneseq
    %v156 = vshrl.u32 %v155, 7
    %v157 = vsub.s32 %v154, %v156
    %v158 = vrot.slane %v142, %v157
    %v160 = vunpack.c.l.s4 1966171168
    %v161 = vunpack.c.0.s8 %v160
    %v162 = vlaneseq
    %v163 = vshrl.u32 %v162, 7
    %v164 = vsub.s32 %v161, %v163
    %v165 = vrot.slane %v149, %v164
    %v167 = vunpack.c.l.s4 1966171168
    %v168 = vunpack.c.0.s8 %v167
    %v169 = vlaneseq
    %v170 = vshrl.u32 %v169, 7
    %v171 = vsub.s32 %v168, %v170
    %v172 = vrot.slane %v150, %v171
    %v174 = vunpack.c.l.s4 1966171168
    %v175 = vunpack.c.0.s8 %v174
    %v176 = vlaneseq
    %v177 = vshrl.u32 %v176, 7
    %v178 = vsub.s32 %v175, %v177
    %v179 = vrot.slane %v151, %v178
    %v180 = vcombine.high %v158, %v158
    %v181 = vcombine.high %v172, %v172
    %v284 = vunpack.c.l.b16 %v26
    %v285 = vunpack.c.h.b16 %v26
    %v286 = vunpack.c.l.b16 %v27
    %v287 = vunpack.c.h.b16 %v27
    %v288 = vunpack.c.l.b16 %v28
    %v289 = vunpack.c.h.b16 %v28
    %v290 = vunpack.c.l.b16 %v29
    %v291 = vunpack.c.h.b16 %v29
    %v292 = vunpack.c.l.b16 %v30
    %v293 = vunpack.c.h.b16 %v30
    %v294 = vunpack.c.l.b16 %v31
    %v295 = vunpack.c.h.b16 %v31
    %v296 = vunpack.c.l.b16 %v32
    %v297 = vunpack.c.h.b16 %v32
    %v298 = vunpack.c.l.b16 %v33
    %v299 = vunpack.c.h.b16 %v33
    %v300 = vunpack.c.l.b16 %v34
    %v301 = vunpack.c.h.b16 %v34
    %v302 = vunpack.c.l.b16 %v35
    %v303 = vunpack.c.h.b16 %v35
    %v304 = vunpack.c.l.b16 %v36
    %v305 = vunpack.c.h.b16 %v36
    %v306 = vunpack.c.l.b16 %v37
    %v307 = vunpack.c.h.b16 %v37
    %v308 = vunpack.c.l.b16 %v38
    %v309 = vunpack.c.h.b16 %v38
    %v310 = vunpack.c.l.b16 %v39
    %v311 = vunpack.c.h.b16 %v39
    %v312 = vunpack.c.l.b16 %v40
    %v313 = vunpack.c.h.b16 %v40
    %v314 = vunpack.c.l.b16 %v41
    %v315 = vunpack.c.h.b16 %v41
    %v316 = vunpack.c.l.b16 %v42
    %v317 = vunpack.c.h.b16 %v42
    %v318 = vunpack.c.l.b16 %v43
    %v319 = vunpack.c.h.b16 %v43
    %v320 = vunpack.c.l.b16 %v44
    %v321 = vunpack.c.h.b16 %v44
    %v322 = vunpack.c.l.b16 %v45
    %v323 = vunpack.c.h.b16 %v45
    %v324 = vunpack.c.l.b16 %v46
    %v325 = vunpack.c.h.b16 %v46
    %v326 = vunpack.c.l.b16 %v47
    %v327 = vunpack.c.h.b16 %v47
    %v328 = vunpack.c.l.b16 %v48
    %v329 = vunpack.c.h.b16 %v48
    %v330 = vunpack.c.l.b16 %v49
    %v331 = vunpack.c.h.b16 %v49
    %v332 = vunpack.c.l.b16 %v50
    %v333 = vunpack.c.h.b16 %v50
    %v334 = vunpack.c.l.b16 %v51
    %v335 = vunpack.c.h.b16 %v51
    %v336 = vunpack.c.l.b16 %v52
    %v337 = vunpack.c.h.b16 %v52
    %v338 = vunpack.c.l.b16 %v53
    %v339 = vunpack.c.h.b16 %v53
    %v340 = vunpack.c.l.b16 %v54
    %v341 = vunpack.c.h.b16 %v54
    %v342 = vunpack.c.l.b16 %v55
    %v343 = vunpack.c.h.b16 %v55
    %v344 = vunpack.c.l.b16 %v56
    %v345 = vunpack.c.h.b16 %v56
    %v346 = vunpack.c.l.b16 %v57
    %v347 = vunpack.c.h.b16 %v57
    %v348 = vunpack.c.l.b16 %v58
    %v349 = vunpack.c.h.b16 %v58
    %v350 = vunpack.c.l.b16 %v59
    %v351 = vunpack.c.h.b16 %v59
    %v352 = vunpack.c.l.b16 %v60
    %v353 = vunpack.c.h.b16 %v60
    %v354 = vunpack.c.l.b16 %v61
    %v355 = vunpack.c.h.b16 %v61
    %v356 = vunpack.c.l.b16 %v62
    %v357 = vunpack.c.h.b16 %v62
    %v358 = vunpack.c.l.b16 %v63
    %v359 = vunpack.c.h.b16 %v63
    %v360 = vunpack.c.l.b16 %v64
    %v361 = vunpack.c.h.b16 %v64
    %v362 = vunpack.c.l.b16 %v65
    %v363 = vunpack.c.h.b16 %v65
    %v364 = vunpack.c.l.b16 %v66
    %v365 = vunpack.c.h.b16 %v66
    %v366 = vunpack.c.l.b16 %v67
    %v367 = vunpack.c.h.b16 %v67
    %v368 = vunpack.c.l.b16 %v68
    %v369 = vunpack.c.h.b16 %v68
    %v370 = vunpack.c.l.b16 %v69
    %v371 = vunpack.c.h.b16 %v69
    %v372 = vunpack.c.l.b16 %v70
    %v373 = vunpack.c.h.b16 %v70
    %v374 = vunpack.c.l.b16 %v71
    %v375 = vunpack.c.h.b16 %v71
    %v376 = vunpack.c.l.b16 %v72
    %v377 = vunpack.c.h.b16 %v72
    %v378 = vunpack.c.l.b16 %v73
    %v379 = vunpack.c.h.b16 %v73
    %v380 = vunpack.c.l.b16 %v74
    %v381 = vunpack.c.h.b16 %v74
    %v382 = vunpack.c.l.b16 %v75
    %v383 = vunpack.c.h.b16 %v75
    %v384 = vunpack.c.l.b16 %v76
    %v385 = vunpack.c.h.b16 %v76
    %v386 = vunpack.c.l.b16 %v77
    %v387 = vunpack.c.h.b16 %v77
    %v388 = vunpack.c.l.b16 %v78
    %v389 = vunpack.c.h.b16 %v78
    %v390 = vunpack.c.l.b16 %v79
    %v391 = vunpack.c.h.b16 %v79
    %v392 = vunpack.c.l.b16 %v80
    %v393 = vunpack.c.h.b16 %v80
    %v394 = vunpack.c.l.b16 %v81
    %v395 = vunpack.c.h.b16 %v81
    %v396 = vunpack.c.l.b16 %v82
    %v397 = vunpack.c.h.b16 %v82
    %v398 = vunpack.c.l.b16 %v83
    %v399 = vunpack.c.h.b16 %v83
    %v400 = vunpack.c.l.b16 %v84
    %v401 = vunpack.c.h.b16 %v84
    %v402 = vunpack.c.l.b16 %v85
    %v403 = vunpack.c.h.b16 %v85
    %v404 = vunpack.c.l.b16 %v86
    %v405 = vunpack.c.h.b16 %v86
    %v406 = vunpack.c.l.b16 %v87
    %v407 = vunpack.c.h.b16 %v87
    %v408 = vunpack.c.l.b16 %v88
    %v409 = vunpack.c.h.b16 %v88
    %v410 = vunpack.c.l.b16 %v89
    %v411 = vunpack.c.h.b16 %v89
    %v412 = vunpack.c.l.b16 %v90
    %v413 = vunpack.c.h.b16 %v90
    %v414 = vunpack.c.l.b16 %v91
    %v415 = vunpack.c.h.b16 %v91
    %v416 = vunpack.c.l.b16 %v92
    %v417 = vunpack.c.h.b16 %v92
    %v418 = vunpack.c.l.b16 %v93
    %v419 = vunpack.c.h.b16 %v93
    %v420 = vunpack.c.l.b16 %v94
    %v421 = vunpack.c.h.b16 %v94
    %v422 = vunpack.c.l.b16 %v95
    %v423 = vunpack.c.h.b16 %v95
    %v424 = vunpack.c.l.b16 %v96
    %v425 = vunpack.c.h.b16 %v96
    %v426 = vunpack.c.l.b16 %v97
    %v427 = vunpack.c.h.b16 %v97
    %v428 = vunpack.c.l.b16 %v98
    %v429 = vunpack.c.h.b16 %v98
    %v430 = vunpack.c.l.b16 %v99
    %v431 = vunpack.c.h.b16 %v99
    %v432 = vunpack.c.l.b16 %v100
    %v433 = vunpack.c.h.b16 %v100
    %v434 = vunpack.c.l.b16 %v101
    %v435 = vunpack.c.h.b16 %v101
    %v436 = vunpack.c.l.b16 %v102
    %v437 = vunpack.c.h.b16 %v102
    %v438 = vunpack.c.l.b16 %v103
    %v439 = vunpack.c.h.b16 %v103
    %v440 = vunpack.c.l.b16 %v104
    %v441 = vunpack.c.h.b16 %v104
    %v442 = vunpack.c.l.b16 %v105
    %v443 = vunpack.c.h.b16 %v105
    %v444 = vunpack.c.l.b16 %v106
    %v445 = vunpack.c.h.b16 %v106
    %v446 = vunpack.c.l.b16 %v107
    %v447 = vunpack.c.h.b16 %v107
    %v448 = vunpack.c.l.b16 %v108
    %v449 = vunpack.c.h.b16 %v108
    %v450 = vunpack.c.l.b16 %v109
    %v451 = vunpack.c.h.b16 %v109
    %v452 = vunpack.c.l.b16 %v110
    %v453 = vunpack.c.h.b16 %v110
    %v454 = vunpack.c.l.b16 %v111
    %v455 = vunpack.c.h.b16 %v111
    %v456 = vunpack.c.l.b16 %v112
    %v457 = vunpack.c.h.b16 %v112
    %v458 = vunpack.c.l.b16 %v113
    %v459 = vunpack.c.h.b16 %v113
    %v460 = vunpack.c.l.b16 %v114
    %v461 = vunpack.c.h.b16 %v114
    %v462 = vunpack.c.l.b16 %v115
    %v463 = vunpack.c.h.b16 %v115
    %v464 = vunpack.c.l.b16 %v116
    %v465 = vunpack.c.h.b16 %v116
    %v466 = vunpack.c.l.b16 %v117
    %v467 = vunpack.c.h.b16 %v117
    %v468 = vunpack.c.l.b16 %v118
    %v469 = vunpack.c.h.b16 %v118
    %v470 = vunpack.c.l.b16 %v119
    %v471 = vunpack.c.h.b16 %v119
    %v472 = vunpack.c.l.b16 %v120
    %v473 = vunpack.c.h.b16 %v120
    %v474 = vunpack.c.l.b16 %v121
    %v475 = vunpack.c.h.b16 %v121
    %v476 = vpack.c.b16 %v286, %v284
    %v477 = vpack.c.b16 %v287, %v285
    %v478 = vpack.c.b16 %v290, %v288
    %v479 = vpack.c.b16 %v291, %v289
    %v480 = vpack.c.b16 %v294, %v292
    %v481 = vpack.c.b16 %v295, %v293
    %v482 = vpack.c.b16 %v298, %v296
    %v483 = vpack.c.b16 %v299, %v297
    %v484 = vpack.c.b16 %v302, %v300
    %v485 = vpack.c.b16 %v303, %v301
    %v486 = vpack.c.b16 %v306, %v304
    %v487 = vpack.c.b16 %v307, %v305
    %v488 = vpack.c.b16 %v310, %v308
    %v489 = vpack.c.b16 %v311, %v309
    %v490 = vpack.c.b16 %v314, %v312
    %v491 = vpack.c.b16 %v315, %v313
    %v492 = vpack.c.b16 %v318, %v316
    %v493 = vpack.c.b16 %v319, %v317
    %v494 = vpack.c.b16 %v322, %v320
    %v495 = vpack.c.b16 %v323, %v321
    %v496 = vpack.c.b16 %v326, %v324
    %v497 = vpack.c.b16 %v327, %v325
    %v498 = vpack.c.b16 %v330, %v328
    %v499 = vpack.c.b16 %v331, %v329
    %v500 = vpack.c.b16 %v334, %v332
    %v501 = vpack.c.b16 %v335, %v333
    %v502 = vpack.c.b16 %v338, %v336
    %v503 = vpack.c.b16 %v339, %v337
    %v504 = vpack.c.b16 %v342, %v340
    %v505 = vpack.c.b16 %v343, %v341
    %v506 = vpack.c.b16 %v346, %v344
    %v507 = vpack.c.b16 %v347, %v345
    %v508 = vpack.c.b16 %v350, %v348
    %v509 = vpack.c.b16 %v351, %v349
    %v510 = vpack.c.b16 %v354, %v352
    %v511 = vpack.c.b16 %v355, %v353
    %v512 = vpack.c.b16 %v358, %v356
    %v513 = vpack.c.b16 %v359, %v357
    %v514 = vpack.c.b16 %v362, %v360
    %v515 = vpack.c.b16 %v363, %v361
    %v516 = vpack.c.b16 %v366, %v364
    %v517 = vpack.c.b16 %v367, %v365
    %v518 = vpack.c.b16 %v370, %v368
    %v519 = vpack.c.b16 %v371, %v369
    %v520 = vpack.c.b16 %v374, %v372
    %v521 = vpack.c.b16 %v375, %v373
    %v522 = vpack.c.b16 %v378, %v376
    %v523 = vpack.c.b16 %v379, %v377
    %v524 = vpack.c.b16 %v382, %v380
    %v525 = vpack.c.b16 %v383, %v381
    %v526 = vpack.c.b16 %v386, %v384
    %v527 = vpack.c.b16 %v387, %v385
    %v528 = vpack.c.b16 %v390, %v388
    %v529 = vpack.c.b16 %v391, %v389
    %v530 = vpack.c.b16 %v394, %v392
    %v531 = vpack.c.b16 %v395, %v393
    %v532 = vpack.c.b16 %v398, %v396
    %v533 = vpack.c.b16 %v399, %v397
    %v534 = vpack.c.b16 %v402, %v400
    %v535 = vpack.c.b16 %v403, %v401
    %v536 = vpack.c.b16 %v406, %v404
    %v537 = vpack.c.b16 %v407, %v405
    %v538 = vpack.c.b16 %v410, %v408
    %v539 = vpack.c.b16 %v411, %v409
    %v540 = vpack.c.b16 %v414, %v412
    %v541 = vpack.c.b16 %v415, %v413
    %v542 = vpack.c.b16 %v418, %v416
    %v543 = vpack.c.b16 %v419, %v417
    %v544 = vpack.c.b16 %v422, %v420
    %v545 = vpack.c.b16 %v423, %v421
    %v546 = vpack.c.b16 %v426, %v424
    %v547 = vpack.c.b16 %v427, %v425
    %v548 = vpack.c.b16 %v430, %v428
    %v549 = vpack.c.b16 %v431, %v429
    %v550 = vpack.c.b16 %v434, %v432
    %v551 = vpack.c.b16 %v435, %v433
    %v552 = vpack.c.b16 %v438, %v436
    %v553 = vpack.c.b16 %v439, %v437
    %v554 = vpack.c.b16 %v442, %v440
    %v555 = vpack.c.b16 %v443, %v441
    %v556 = vpack.c.b16 %v446, %v444
    %v557 = vpack.c.b16 %v447, %v445
    %v558 = vpack.c.b16 %v450, %v448
    %v559 = vpack.c.b16 %v451, %v449
    %v560 = vpack.c.b16 %v454, %v452
    %v561 = vpack.c.b16 %v455, %v453
    %v562 = vpack.c.b16 %v458, %v456
    %v563 = vpack.c.b16 %v459, %v457
    %v564 = vpack.c.b16 %v462, %v460
    %v565 = vpack.c.b16 %v463, %v461
    %v566 = vpack.c.b16 %v466, %v464
    %v567 = vpack.c.b16 %v467, %v465
    %v568 = vpack.c.b16 %v470, %v468
    %v569 = vpack.c.b16 %v471, %v469
    %v570 = vpack.c.b16 %v474, %v472
    %v571 = vpack.c.b16 %v475, %v473
    %668 = vmatprep.subr.bf16.mxu0 %v477
    %669 = vmatpush1.bf16.msra.mxu0 %v476
    %670 = vmatprep.subr.bf16.mxu0 %v479
    %671 = vmatpush1.bf16.msra.mxu0 %v478
    %672 = vmatprep.subr.bf16.mxu0 %v481
    %673 = vmatpush1.bf16.msra.mxu0 %v480
    %674 = vmatprep.subr.bf16.mxu0 %v483
    %675 = vmatpush1.bf16.msra.mxu0 %v482
    %676 = vmatprep.subr.bf16.mxu0 %v485
    %677 = vmatpush1.bf16.msra.mxu0 %v484
    %678 = vmatprep.subr.bf16.mxu0 %v487
    %679 = vmatpush1.bf16.msra.mxu0 %v486
    %680 = vmatprep.subr.bf16.mxu0 %v489
    %681 = vmatpush1.bf16.msra.mxu0 %v488
    %682 = vmatprep.subr.bf16.mxu0 %v491
    %683 = vmatpush1.bf16.msra.mxu0 %v490
    %684 = vmatprep.subr.bf16.mxu0 %v493
    %685 = vmatpush1.bf16.msra.mxu0 %v492
    %686 = vmatprep.subr.bf16.mxu0 %v495
    %687 = vmatpush1.bf16.msra.mxu0 %v494
    %688 = vmatprep.subr.bf16.mxu0 %v497
    %689 = vmatpush1.bf16.msra.mxu0 %v496
    %690 = vmatprep.subr.bf16.mxu0 %v499
    %691 = vmatpush1.bf16.msra.mxu0 %v498
    %692 = vmatprep.subr.bf16.mxu0 %v501
    %693 = vmatpush1.bf16.msra.mxu0 %v500
    %694 = vmatprep.subr.bf16.mxu0 %v503
    %695 = vmatpush1.bf16.msra.mxu0 %v502
    %696 = vmatprep.subr.bf16.mxu0 %v505
    %697 = vmatpush1.bf16.msra.mxu0 %v504
    %698 = vmatprep.subr.bf16.mxu0 %v507
    %699 = vmatpush1.bf16.msra.mxu0 %v506
    %700 = vmatprep.mubr.bf16.mxu0 %v172
    %701 = vmatmul.mubr.bf16.gmra.mrb[0].mxu0 %v158
    %v702 = vpop.f32.mrb[0].mxu0
    %v703 = vadd.f32 %v127, %v702
    %v704 = vpop.f32.mrb[0].mxu0
    %v705 = vadd.f32 %v131, %v704
    %v706 = vpop.f32.mrb[0].mxu0
    %v707 = vpop.f32.mrb[0].mxu0
    %708 = vdwg.mxu0
    %709 = vmatprep.subr.bf16.mxu0 %v509
    %710 = vmatpush1.bf16.msra.mxu0 %v508
    %711 = vmatprep.subr.bf16.mxu0 %v511
    %712 = vmatpush1.bf16.msra.mxu0 %v510
    %713 = vmatprep.subr.bf16.mxu0 %v513
    %714 = vmatpush1.bf16.msra.mxu0 %v512
    %715 = vmatprep.subr.bf16.mxu0 %v515
    %716 = vmatpush1.bf16.msra.mxu0 %v514
    %717 = vmatprep.subr.bf16.mxu0 %v517
    %718 = vmatpush1.bf16.msra.mxu0 %v516
    %719 = vmatprep.subr.bf16.mxu0 %v519
    %720 = vmatpush1.bf16.msra.mxu0 %v518
    %721 = vmatprep.subr.bf16.mxu0 %v521
    %722 = vmatpush1.bf16.msra.mxu0 %v520
    %723 = vmatprep.subr.bf16.mxu0 %v523
    %724 = vmatpush1.bf16.msra.mxu0 %v522
    %725 = vmatprep.subr.bf16.mxu0 %v525
    %726 = vmatpush1.bf16.msra.mxu0 %v524
    %727 = vmatprep.subr.bf16.mxu0 %v527
    %728 = vmatpush1.bf16.msra.mxu0 %v526
    %729 = vmatprep.subr.bf16.mxu0 %v529
    %730 = vmatpush1.bf16.msra.mxu0 %v528
    %731 = vmatprep.subr.bf16.mxu0 %v531
    %732 = vmatpush1.bf16.msra.mxu0 %v530
    %733 = vmatprep.subr.bf16.mxu0 %v533
    %734 = vmatpush1.bf16.msra.mxu0 %v532
    %735 = vmatprep.subr.bf16.mxu0 %v535
    %736 = vmatpush1.bf16.msra.mxu0 %v534
    %737 = vmatprep.subr.bf16.mxu0 %v537
    %738 = vmatpush1.bf16.msra.mxu0 %v536
    %739 = vmatprep.subr.bf16.mxu0 %v539
    %740 = vmatpush1.bf16.msra.mxu0 %v538
    %741 = vmatprep.mubr.bf16.mxu0 %v181
    %742 = vmatmul.mubr.bf16.gmra.mrb[0].mxu0 %v180
    %v743 = vpop.f32.mrb[0].mxu0
    %v744 = vadd.f32 %v703, %v743
    %v745 = vpop.f32.mrb[0].mxu0
    %v746 = vadd.f32 %v705, %v745
    %v747 = vpop.f32.mrb[0].mxu0
    %v748 = vpop.f32.mrb[0].mxu0
    %749 = vdwg.mxu0
    %750 = vmatprep.subr.bf16.mxu0 %v541
    %751 = vmatpush1.bf16.msra.mxu0 %v540
    %752 = vmatprep.subr.bf16.mxu0 %v543
    %753 = vmatpush1.bf16.msra.mxu0 %v542
    %754 = vmatprep.subr.bf16.mxu0 %v545
    %755 = vmatpush1.bf16.msra.mxu0 %v544
    %756 = vmatprep.subr.bf16.mxu0 %v547
    %757 = vmatpush1.bf16.msra.mxu0 %v546
    %758 = vmatprep.subr.bf16.mxu0 %v549
    %759 = vmatpush1.bf16.msra.mxu0 %v548
    %760 = vmatprep.subr.bf16.mxu0 %v551
    %761 = vmatpush1.bf16.msra.mxu0 %v550
    %762 = vmatprep.subr.bf16.mxu0 %v553
    %763 = vmatpush1.bf16.msra.mxu0 %v552
    %764 = vmatprep.subr.bf16.mxu0 %v555
    %765 = vmatpush1.bf16.msra.mxu0 %v554
    %766 = vmatprep.subr.bf16.mxu0 %v557
    %767 = vmatpush1.bf16.msra.mxu0 %v556
    %768 = vmatprep.subr.bf16.mxu0 %v559
    %769 = vmatpush1.bf16.msra.mxu0 %v558
    %770 = vmatprep.subr.bf16.mxu0 %v561
    %771 = vmatpush1.bf16.msra.mxu0 %v560
    %772 = vmatprep.subr.bf16.mxu0 %v563
    %773 = vmatpush1.bf16.msra.mxu0 %v562
    %774 = vmatprep.subr.bf16.mxu0 %v565
    %775 = vmatpush1.bf16.msra.mxu0 %v564
    %776 = vmatprep.subr.bf16.mxu0 %v567
    %777 = vmatpush1.bf16.msra.mxu0 %v566
    %778 = vmatprep.subr.bf16.mxu0 %v569
    %779 = vmatpush1.bf16.msra.mxu0 %v568
    %780 = vmatprep.subr.bf16.mxu0 %v571
    %781 = vmatpush1.bf16.msra.mxu0 %v570
    %782 = vmatprep.mubr.bf16.mxu0 %v179
    %783 = vmatmul.mubr.bf16.gmra.mrb[0].mxu0 %v165
    %v784 = vpop.f32.mrb[0].mxu0
    %v785 = vadd.f32 %v744, %v784
    %v786 = vpop.f32.mrb[0].mxu0
    %v787 = vadd.f32 %v746, %v786
    %v788 = vpop.f32.mrb[0].mxu0
    %v789 = vpop.f32.mrb[0].mxu0
    %790 = vdwg.mxu0
    %v791 = vmax.f32 %v785, 0.0
    %v792 = vmax.f32 %v787, 0.0
    %v795 = vcombine.low %v791, %v792
    %v797 = vunpack.c.l.s4 1983009808
    %v798 = vunpack.c.0.s8 %v797
    %v799 = vlaneseq
    %v800 = vshrl.u32 %v799, 7
    %v801 = vsub.s32 %v798, %v800
    %v802 = vrot.slane %v795, %v801
    %804 = vst [vmem:[#allocation2] sm:$0xf] %v802
    %v805 = vpack.c.bf16 %v791, %v791
    %v806 = vpack.c.bf16 %v792, %v792
    %v807 = vld [vmem:[%s3] sm:$0xf]
    %v808 = vld [vmem:[%s3 + $0x4] sm:$0xf]
    %v809 = vld [vmem:[%s3 + $0x8] sm:$0xf]
    %v810 = vld [vmem:[%s3 + $0xc] sm:$0xf]
    %v811 = vld [vmem:[%s3 + $0x10] sm:$0xf]
    %v812 = vld [vmem:[%s3 + $0x14] sm:$0xf]
    %v813 = vld [vmem:[%s3 + $0x18] sm:$0xf]
    %v814 = vld [vmem:[%s3 + $0x1c] sm:$0xf]
    %v815 = vld [vmem:[%s3 + $0x20] sm:$0xf]
    %v816 = vld [vmem:[%s3 + $0x24] sm:$0xf]
    %v817 = vld [vmem:[%s3 + $0x28] sm:$0xf]
    %v818 = vld [vmem:[%s3 + $0x2c] sm:$0xf]
    %v819 = vld [vmem:[%s3 + $0x30] sm:$0xf]
    %v820 = vld [vmem:[%s3 + $0x34] sm:$0xf]
    %v821 = vld [vmem:[%s3 + $0x38] sm:$0xf]
    %v822 = vld [vmem:[%s3 + $0x3c] sm:$0xf]
    %v823 = vld [vmem:[%s3 + $0x40] sm:$0xf]
    %v824 = vld [vmem:[%s3 + $0x44] sm:$0xf]
    %v825 = vld [vmem:[%s3 + $0x48] sm:$0xf]
    %v826 = vld [vmem:[%s3 + $0x4c] sm:$0xf]
    %v827 = vld [vmem:[%s3 + $0x50] sm:$0xf]
    %v828 = vld [vmem:[%s3 + $0x54] sm:$0xf]
    %v829 = vld [vmem:[%s3 + $0x58] sm:$0xf]
    %v830 = vld [vmem:[%s3 + $0x5c] sm:$0xf]
    %v831 = vld [vmem:[%s3 + $0x60] sm:$0xf]
    %v832 = vld [vmem:[%s3 + $0x64] sm:$0xf]
    %v833 = vld [vmem:[%s3 + $0x68] sm:$0xf]
    %v834 = vld [vmem:[%s3 + $0x6c] sm:$0xf]
    %v835 = vld [vmem:[%s3 + $0x70] sm:$0xf]
    %v836 = vld [vmem:[%s3 + $0x74] sm:$0xf]
    %v837 = vld [vmem:[%s3 + $0x78] sm:$0xf]
    %v838 = vld [vmem:[%s3 + $0x7c] sm:$0xf]
    %v839 = vld [vmem:[%s4] sm:$0x1]
    %v841 = vlaneseq
    %v842 = vshrl.u32 %v841, 7
    %v843 = vsub.s32 0, %v842
    %v844 = vrot.slane %v839, %v843
    %v878 = vunpack.c.l.b16 %v807
    %v879 = vunpack.c.l.b16 %v808
    %v880 = vunpack.c.l.b16 %v809
    %v881 = vunpack.c.l.b16 %v810
    %v882 = vunpack.c.l.b16 %v811
    %v883 = vunpack.c.l.b16 %v812
    %v884 = vunpack.c.l.b16 %v813
    %v885 = vunpack.c.l.b16 %v814
    %v886 = vunpack.c.l.b16 %v815
    %v887 = vunpack.c.l.b16 %v816
    %v888 = vunpack.c.l.b16 %v817
    %v889 = vunpack.c.l.b16 %v818
    %v890 = vunpack.c.l.b16 %v819
    %v891 = vunpack.c.l.b16 %v820
    %v892 = vunpack.c.l.b16 %v821
    %v893 = vunpack.c.l.b16 %v822
    %v894 = vunpack.c.l.b16 %v823
    %v895 = vunpack.c.l.b16 %v824
    %v896 = vunpack.c.l.b16 %v825
    %v897 = vunpack.c.l.b16 %v826
    %v898 = vunpack.c.l.b16 %v827
    %v899 = vunpack.c.l.b16 %v828
    %v900 = vunpack.c.l.b16 %v829
    %v901 = vunpack.c.l.b16 %v830
    %v902 = vunpack.c.l.b16 %v831
    %v903 = vunpack.c.l.b16 %v832
    %v904 = vunpack.c.l.b16 %v833
    %v905 = vunpack.c.l.b16 %v834
    %v906 = vunpack.c.l.b16 %v835
    %v907 = vunpack.c.l.b16 %v836
    %v908 = vunpack.c.l.b16 %v837
    %v909 = vunpack.c.l.b16 %v838
    %v910 = vpack.c.b16 %v879, %v878
    %v911 = vpack.c.b16 %v881, %v880
    %v912 = vpack.c.b16 %v883, %v882
    %v913 = vpack.c.b16 %v885, %v884
    %v914 = vpack.c.b16 %v887, %v886
    %v915 = vpack.c.b16 %v889, %v888
    %v916 = vpack.c.b16 %v891, %v890
    %v917 = vpack.c.b16 %v893, %v892
    %v918 = vpack.c.b16 %v895, %v894
    %v919 = vpack.c.b16 %v897, %v896
    %v920 = vpack.c.b16 %v899, %v898
    %v921 = vpack.c.b16 %v901, %v900
    %v922 = vpack.c.b16 %v903, %v902
    %v923 = vpack.c.b16 %v905, %v904
    %v924 = vpack.c.b16 %v907, %v906
    %v925 = vpack.c.b16 %v909, %v908
    %942 = vmatprep.subr.bf16.mxu0 0
    %943 = vmatpush1.bf16.msra.mxu0 %v910
    %944 = vmatprep.subr.bf16.mxu0 0
    %945 = vmatpush1.bf16.msra.mxu0 %v911
    %946 = vmatprep.subr.bf16.mxu0 0
    %947 = vmatpush1.bf16.msra.mxu0 %v912
    %948 = vmatprep.subr.bf16.mxu0 0
    %949 = vmatpush1.bf16.msra.mxu0 %v913
    %950 = vmatprep.subr.bf16.mxu0 0
    %951 = vmatpush1.bf16.msra.mxu0 %v914
    %952 = vmatprep.subr.bf16.mxu0 0
    %953 = vmatpush1.bf16.msra.mxu0 %v915
    %954 = vmatprep.subr.bf16.mxu0 0
    %955 = vmatpush1.bf16.msra.mxu0 %v916
    %956 = vmatprep.subr.bf16.mxu0 0
    %957 = vmatpush1.bf16.msra.mxu0 %v917
    %958 = vmatprep.subr.bf16.mxu0 0
    %959 = vmatpush1.bf16.msra.mxu0 %v918
    %960 = vmatprep.subr.bf16.mxu0 0
    %961 = vmatpush1.bf16.msra.mxu0 %v919
    %962 = vmatprep.subr.bf16.mxu0 0
    %963 = vmatpush1.bf16.msra.mxu0 %v920
    %964 = vmatprep.subr.bf16.mxu0 0
    %965 = vmatpush1.bf16.msra.mxu0 %v921
    %966 = vmatprep.subr.bf16.mxu0 0
    %967 = vmatpush1.bf16.msra.mxu0 %v922
    %968 = vmatprep.subr.bf16.mxu0 0
    %969 = vmatpush1.bf16.msra.mxu0 %v923
    %970 = vmatprep.subr.bf16.mxu0 0
    %971 = vmatpush1.bf16.msra.mxu0 %v924
    %972 = vmatprep.subr.bf16.mxu0 0
    %973 = vmatpush1.bf16.msra.mxu0 %v925
    %974 = vmatprep.mubr.bf16.mxu0 %v806
    %975 = vmatmul.mubr.bf16.gmra.mrb[0].mxu0 %v805
    %v976 = vpop.f32.mrb[0].mxu0
    %v977 = vadd.f32 %v844, %v976
    %v978 = vpop.f32.mrb[0].mxu0
    %v979 = vpop.f32.mrb[0].mxu0
    %v980 = vpop.f32.mrb[0].mxu0
    %981 = vdwg.mxu0
    %982 = vst [vmem:[#allocation4] sm:$0x3] %v977
    // Predicated region
    $region22: #{clip_baseline_forward.3} parent=1 // pred_check
      _
    $region23: #{clip_baseline_forward.3} parent=1 // pred_check_branch
      %984 = sbr.rel (0) target = $region25
    $region24: #{clip_baseline_forward.3} parent=1 // pred_region
      %s986 = ssub.s32 64, 64
      %987 = vsyncadd [#allocation3], %s986
      %s989 = sshll.u32 [#allocation2], 4
      %s990 = int_to_ptr.vmem [resolvable:$true] %s989
      %992 = dma.vmem_to_hbm [thread:$0]  %s990, 64, %s5, [#allocation3]
    $region25: #{clip_baseline_forward.3} parent=1 // pred_fallthru
      _
    // Predicated region
    $region26: #{clip_baseline_forward.3} parent=1 // pred_check
      _
    $region27: #{clip_baseline_forward.3} parent=1 // pred_check_branch
      %994 = sbr.rel (0) target = $region29
    $region28: #{clip_baseline_forward.3} parent=1 // pred_region
      %s996 = ssub.s32 32, 32
      %997 = vsyncadd [#allocation5], %s996
      %s999 = sshll.u32 [#allocation4], 4
      %s1000 = int_to_ptr.vmem [resolvable:$true] %s999
      %1002 = dma.vmem_to_hbm [thread:$0]  %s1000, 32, %s6, [#allocation5]
    $region29: #{clip_baseline_forward.3} parent=1 // pred_fallthru
      _
    // Predicated region
    $region30: #{clip_baseline_forward.3} parent=1 // pred_check
      _
    $region31: #{clip_baseline_forward.3} parent=1 // pred_check_branch
      %1004 = sbr.rel (0) target = $region33
    $region32: #{clip_baseline_forward.3} parent=1 // pred_region
      %1005 = dma.done [#allocation3], 64
    $region33: #{clip_baseline_forward.3} parent=1 // pred_fallthru
      _
    // Predicated region
    $region34: #{clip_baseline_forward.3} parent=1 // pred_check
      _
    $region35: #{clip_baseline_forward.3} parent=1 // pred_check_branch
      %1007 = sbr.rel (0) target = $region37
    $region36: #{clip_baseline_forward.3} parent=1 // pred_region
      %1008 = dma.done [#allocation5], 32
    $region37: #{clip_baseline_forward.3} parent=1 // pred_fallthru
      _
    %1009 = vsyncpa [#allocation3], 1
    %1010 = vsyncpa [#allocation5], 1

// kernel: clip_baseline_forward.2
$region0: #{clip_baseline_forward.2}
  #allocation0 [shape = 'u32[]', space=smem, size = 0x4, offset = 0x4, fixed_abs, tag = 'smem constant byte address 0x4 - core index']
  #allocation1 [shape = 'u32[144,128]{1,0:T(1,128)}', space=vmem, size = 0x12000, scoped, tag = 'internal scratch']
  #allocation2 [shape = 'f32[1,768]{1,0:T(1,128)}', space=vmem, size = 0xc00, scoped, tag = 'scratch operand']
  %s0 = inlined_call_operand.vmem [shape: bf16[2,4,256], index: 0, kind: input, shape index: {}]
  %s1 = inlined_call_operand.vmem [shape: bf16[256,768], index: 1, kind: input, shape index: {}]
  %s2 = inlined_call_operand.vmem [shape: f32[1,768], index: 2, kind: input, shape index: {}]
  %s3 = inlined_call_operand.vmem [shape: f32[2,1,768], index: 3, kind: output, shape index: {}]
  %s4 = sld [smem:[#allocation0]]
  $region53: #{clip_baseline_forward.2} parent=0
    _
  %s6 = ssub.s32 1, %s4
  %s7 = scalar_select 0, %s6, %s4
  loop: start=0, step=1, limit=4
  $region2: #{clip_baseline_forward.2} parent=0 // loop_pre_header
    _
  $region3: #{clip_baseline_forward.2} parent=0 // loop_header
    %s9 = sphi 0, %s13
    %p10 = scmp.ge.s32.totalorder %s9, 4
    %s16 = sphi 0, %s28
    %s17 = sphi 0, %s24
    %s18 = sphi 0, %s16
    %s19 = sphi 0, %s17
    %s20 = sphi 0, %s18
    %s21 = sphi 0, %s19
    %s33 = sphi 0, %s35
    %s36 = sphi 0, %s33
    %s37 = sphi 0, %s36
    %s53 = sphi 0, %s37
    %s57 = sphi 0, %s57
    %s59 = sphi 0, %s57
    %s60 = sphi 0, %s59
    %s74 = sphi 0, %s60
    %s78 = sphi 0, %s78
    %s80 = sphi 0, %s78
    %s81 = sphi 0, %s80
    %s95 = sphi 0, %s81
    %s101 = sphi 0, %s103
    %s104 = sphi 0, %s101
    %s105 = sphi 0, %s104
    %s121 = sphi 0, %s105
  $region4: #{clip_baseline_forward.2} parent=0 // loop_header_branch
    %12 = sbr.rel (%p10) target = $region8
  $region5: #{clip_baseline_forward.2} parent=0 // loop_body
    %s14 = ssub.s32 %s9, 1
    %s15 = ssub.s32 %s9, 2
    %s22 = sadd.s32 1, %s17
    %p23 = scmp.ge.s32.totalorder %s22, 1
    %s24 = scalar_select %p23, 0, %s22
    %s25 = sadd.s32 1, %s16
    %s26 = scalar_select %p23, %s25, %s16
    %p27 = scmp.ge.s32.totalorder %s26, 2
    %s28 = scalar_select %p27, 0, %s26
    %s29 = ssub.s32 %s16, %s28
    %s30 = ssub.s32 %s17, %s24
    %s31 = sor.u32 %s29, %s30
    %p32 = scmp.eq.s32.totalorder %s31, 0
    %s34 = sadd.s32 %s33, 1
    %s35 = scalar_select %p32, %s33, %s34
    %p38 = pneg %p32
    %p39 = scmp.eq.s32.totalorder %s9, 1
    %p40 = por %p38, %p39
    %p41 = scmp.ne.s32.totalorder %s33, %s36
    %p42 = scmp.eq.s32.totalorder %s9, 0
    %p43 = por %p41, %p42
    %p44 = scmp.ne.s32.totalorder %s33, %s36
    %p45 = scmp.eq.s32.totalorder %s14, 1
    %p46 = por %p44, %p45
    %p47 = scmp.ne.s32.totalorder %s36, %s37
    %p48 = scmp.eq.s32.totalorder %s14, 0
    %p49 = por %p47, %p48
    %p50 = scmp.ne.s32.totalorder %s36, %s37
    %p51 = scmp.eq.s32.totalorder %s15, 1
    %p52 = por %p50, %p51
    %p54 = scmp.ne.s32.totalorder %s37, %s53
    %p55 = scmp.eq.s32.totalorder %s15, 0
    %p56 = por %p54, %p55
    %s58 = sadd.s32 %s57, 1
    %p61 = scmp.eq.s32.totalorder %s9, 1
    %p62 = scmp.ne.s32.totalorder %s57, %s59
    %p63 = scmp.eq.s32.totalorder %s9, 0
    %p64 = por %p62, %p63
    %p65 = scmp.ne.s32.totalorder %s57, %s59
    %p66 = scmp.eq.s32.totalorder %s14, 1
    %p67 = por %p65, %p66
    %p68 = scmp.ne.s32.totalorder %s59, %s60
    %p69 = scmp.eq.s32.totalorder %s14, 0
    %p70 = por %p68, %p69
    %p71 = scmp.ne.s32.totalorder %s59, %s60
    %p72 = scmp.eq.s32.totalorder %s15, 1
    %p73 = por %p71, %p72
    %p75 = scmp.ne.s32.totalorder %s60, %s74
    %p76 = scmp.eq.s32.totalorder %s15, 0
    %p77 = por %p75, %p76
    %s79 = sadd.s32 %s78, 1
    %p82 = scmp.eq.s32.totalorder %s9, 1
    %p83 = scmp.ne.s32.totalorder %s78, %s80
    %p84 = scmp.eq.s32.totalorder %s9, 0
    %p85 = por %p83, %p84
    %p86 = scmp.ne.s32.totalorder %s78, %s80
    %p87 = scmp.eq.s32.totalorder %s14, 1
    %p88 = por %p86, %p87
    %p89 = scmp.ne.s32.totalorder %s80, %s81
    %p90 = scmp.eq.s32.totalorder %s14, 0
    %p91 = por %p89, %p90
    %p92 = scmp.ne.s32.totalorder %s80, %s81
    %p93 = scmp.eq.s32.totalorder %s15, 1
    %p94 = por %p92, %p93
    %p96 = scmp.ne.s32.totalorder %s81, %s95
    %p97 = scmp.eq.s32.totalorder %s15, 0
    %p98 = por %p96, %p97
    %s99 = ssub.s32 %s16, %s28
    %p100 = scmp.eq.s32.totalorder %s99, 0
    %s102 = sadd.s32 %s101, 1
    %s103 = scalar_select %p100, %s101, %s102
    %p106 = pneg %p100
    %p107 = scmp.eq.s32.totalorder %s9, 1
    %p108 = por %p106, %p107
    %p109 = scmp.ne.s32.totalorder %s101, %s104
    %p110 = scmp.eq.s32.totalorder %s9, 0
    %p111 = por %p109, %p110
    %p112 = scmp.ne.s32.totalorder %s101, %s104
    %p113 = scmp.eq.s32.totalorder %s14, 1
    %p114 = por %p112, %p113
    %p115 = scmp.ne.s32.totalorder %s104, %s105
    %p116 = scmp.eq.s32.totalorder %s14, 0
    %p117 = por %p115, %p116
    %p118 = scmp.ne.s32.totalorder %s104, %s105
    %p119 = scmp.eq.s32.totalorder %s15, 1
    %p120 = por %p118, %p119
    %p122 = scmp.ne.s32.totalorder %s105, %s121
    %p123 = scmp.eq.s32.totalorder %s15, 0
    %p124 = por %p122, %p123
    %p125 = scmp.le.s32.totalorder 1, %s9
    %p126 = scmp.lt.s32.totalorder %s9, 3
    %p127 = pnand %p125, %p126
    %p128 = pneg %p127
    // Predicated region
    $region9: #{clip_baseline_forward.2} parent=5 // pred_check
      _
    $region10: #{clip_baseline_forward.2} parent=5 // pred_check_branch
      %130 = sbr.rel (%p127) target = $region12
    $region11: #{clip_baseline_forward.2} parent=5 // pred_region
      %s131 = ssub.s32 %s9, 1
      // Predicated region
      $region13: #{clip_baseline_forward.2} parent=11 // pred_check
        %p132 = pneg %p70
      $region14: #{clip_baseline_forward.2} parent=11 // pred_check_branch
        %134 = sbr.rel (%p132) target = $region16
      $region15: #{clip_baseline_forward.2} parent=11 // pred_region
        _
      $region16: #{clip_baseline_forward.2} parent=11 // pred_fallthru
        _
      // Predicated region
      $region17: #{clip_baseline_forward.2} parent=11 // pred_check
        %p135 = pneg %p91
      $region18: #{clip_baseline_forward.2} parent=11 // pred_check_branch
        %137 = sbr.rel (%p135) target = $region20
      $region19: #{clip_baseline_forward.2} parent=11 // pred_region
        _
      $region20: #{clip_baseline_forward.2} parent=11 // pred_fallthru
        _
    $region12: #{clip_baseline_forward.2} parent=5 // pred_fallthru
      _
    %p138 = scmp.lt.s32.totalorder %s9, 2
    // Predicated region
    $region21: #{clip_baseline_forward.2} parent=5 // pred_check
      %p139 = pneg %p138
    $region22: #{clip_baseline_forward.2} parent=5 // pred_check_branch
      %141 = sbr.rel (%p139) target = $region24
    $region23: #{clip_baseline_forward.2} parent=5 // pred_region
      // Predicated region
      $region25: #{clip_baseline_forward.2} parent=23 // pred_check
        %p142 = pneg %p43
      $region26: #{clip_baseline_forward.2} parent=23 // pred_check_branch
        %144 = sbr.rel (%p142) target = $region28
      $region27: #{clip_baseline_forward.2} parent=23 // pred_region
        %p145 = scmp.lt.s32.totalorder %s16, 1
        %s146 = scalar_select %p145, %s16, 1
        %p147 = scmp.lt.s32.totalorder %s17, 0
        %s148 = scalar_select %p147, %s17, 0
        %s149 = smul.addr %s148, 2
        %s150 = smul.addr %s146, 2
        %s151 = sadd.s32 %s149, %s150
        %s152 = smul.addr %s151, 2
        %s153 = scalar_lea.vmem %s0, %s152
      $region28: #{clip_baseline_forward.2} parent=23 // pred_fallthru
        _
    $region24: #{clip_baseline_forward.2} parent=5 // pred_fallthru
      _
    %p154 = scmp.le.s32.totalorder 1, %s9
    %p155 = scmp.lt.s32.totalorder %s9, 3
    %p156 = pnand %p154, %p155
    %p157 = pneg %p156
    // Predicated region
    $region29: #{clip_baseline_forward.2} parent=5 // pred_check
      _
    $region30: #{clip_baseline_forward.2} parent=5 // pred_check_branch
      %159 = sbr.rel (%p156) target = $region32
    $region31: #{clip_baseline_forward.2} parent=5 // pred_region
      %s160 = ssub.s32 %s9, 1
      %p161 = scmp.lt.s32.totalorder %s18, 1
      %s162 = scalar_select %p161, %s18, 1
      %p163 = scmp.lt.s32.totalorder %s19, 0
      %s164 = scalar_select %p163, %s19, 0
      %s165 = smul.addr %s164, 2
      %s166 = smul.addr %s162, 2
      %s167 = sadd.s32 %s165, %s166
      %s168 = smul.addr %s167, 2
      %s169 = scalar_lea.vmem %s0, %s168
      %p170 = pneg %p49
      %p171 = pneg %p46
      %p172 = pneg %p70
      %p173 = pneg %p67
      %p174 = pneg %p91
      %p175 = pneg %p88
      %p176 = pneg %p117
      %p177 = pneg %p114
      %p178 = scmp.lt.s32.totalorder %s18, 1
      %s179 = scalar_select %p178, %s18, 1
      %s180 = smul.addr %s179, 6
      %s181 = scalar_lea.vmem %s3, %s180
      %p182 = scmp.lt.s32.totalorder %s18, 1
      %s183 = scalar_select %p182, %s18, 1
      %p184 = scmp.lt.s32.totalorder %s19, 0
      %s185 = scalar_select %p184, %s19, 0
      %s186 = smul.addr %s185, 2
      %s187 = smul.addr %s183, 2
      %s188 = sadd.s32 %s186, %s187
      %s189 = smul.addr %s188, 2
      %s190 = scalar_lea.vmem %s0, %s189
      %p191 = scmp.lt.s32.totalorder %s18, 1
      %s192 = scalar_select %p191, %s18, 1
      %s193 = smul.addr %s192, 6
      %s194 = scalar_lea.vmem %s3, %s193
      %p195 = scmp.eq.s32.totalorder %s19, 0
      // Predicated region
      $region33: #{clip_baseline_forward.2} parent=31 // pred_check
        %p196 = pneg %p195
      $region34: #{clip_baseline_forward.2} parent=31 // pred_check_branch
        %198 = sbr.rel (%p196) target = $region36
      $region35: #{clip_baseline_forward.2} parent=31 // pred_region
        %v199 = vlaneseq
        %vm200 = vcmp.ge.s32.totalorder %v199, 0
        %vm201 = vcmp.lt.s32.totalorder %v199, 768
        %vm202 = vmand %vm200, %vm201
        %203 = vst.msk [vmem:[#allocation2] sm:$0x3f] %vm202, 0.0
      $region36: #{clip_baseline_forward.2} parent=31 // pred_fallthru
        _
      %v204 = vld [vmem:[%s190] sm:$0xf]
      %v205 = vld [vmem:[%s1] sm:$0xff]
      %v206 = vld [vmem:[%s1 + $0x8] sm:$0xff]
      %v207 = vld [vmem:[%s1 + $0x10] sm:$0xff]
      %v208 = vld [vmem:[%s1 + $0x18] sm:$0xff]
      %v209 = vld [vmem:[%s1 + $0x20] sm:$0xff]
      %v210 = vld [vmem:[%s1 + $0x28] sm:$0xff]
      %v211 = vld [vmem:[%s1 + $0x30] sm:$0xff]
      %v212 = vld [vmem:[%s1 + $0x38] sm:$0xff]
      %v213 = vld [vmem:[%s1 + $0x40] sm:$0xff]
      %v214 = vld [vmem:[%s1 + $0x48] sm:$0xff]
      %v215 = vld [vmem:[%s1 + $0x50] sm:$0xff]
      %v216 = vld [vmem:[%s1 + $0x58] sm:$0xff]
      %v217 = vld [vmem:[%s1 + $0x60] sm:$0xff]
      %v218 = vld [vmem:[%s1 + $0x68] sm:$0xff]
      %v219 = vld [vmem:[%s1 + $0x70] sm:$0xff]
      %v220 = vld [vmem:[%s1 + $0x78] sm:$0xff]
      %v221 = vld [vmem:[%s1 + $0x80] sm:$0xff]
      %v222 = vld [vmem:[%s1 + $0x88] sm:$0xff]
      %v223 = vld [vmem:[%s1 + $0x90] sm:$0xff]
      %v224 = vld [vmem:[%s1 + $0x98] sm:$0xff]
      %v225 = vld [vmem:[%s1 + $0xa0] sm:$0xff]
      %v226 = vld [vmem:[%s1 + $0xa8] sm:$0xff]
      %v227 = vld [vmem:[%s1 + $0xb0] sm:$0xff]
      %v228 = vld [vmem:[%s1 + $0xb8] sm:$0xff]
      %v229 = vld [vmem:[%s1 + $0xc0] sm:$0xff]
      %v230 = vld [vmem:[%s1 + $0xc8] sm:$0xff]
      %v231 = vld [vmem:[%s1 + $0xd0] sm:$0xff]
      %v232 = vld [vmem:[%s1 + $0xd8] sm:$0xff]
      %v233 = vld [vmem:[%s1 + $0xe0] sm:$0xff]
      %v234 = vld [vmem:[%s1 + $0xe8] sm:$0xff]
      %v235 = vld [vmem:[%s1 + $0xf0] sm:$0xff]
      %v236 = vld [vmem:[%s1 + $0xf8] sm:$0xff]
      %v237 = vld [vmem:[%s1 + $0x100] sm:$0xff]
      %v238 = vld [vmem:[%s1 + $0x108] sm:$0xff]
      %v239 = vld [vmem:[%s1 + $0x110] sm:$0xff]
      %v240 = vld [vmem:[%s1 + $0x118] sm:$0xff]
      %v241 = vld [vmem:[%s1 + $0x120] sm:$0xff]
      %v242 = vld [vmem:[%s1 + $0x128] sm:$0xff]
      %v243 = vld [vmem:[%s1 + $0x130] sm:$0xff]
      %v244 = vld [vmem:[%s1 + $0x138] sm:$0xff]
      %v245 = vld [vmem:[%s1 + $0x140] sm:$0xff]
      %v246 = vld [vmem:[%s1 + $0x148] sm:$0xff]
      %v247 = vld [vmem:[%s1 + $0x150] sm:$0xff]
      %v248 = vld [vmem:[%s1 + $0x158] sm:$0xff]
      %v249 = vld [vmem:[%s1 + $0x160] sm:$0xff]
      %v250 = vld [vmem:[%s1 + $0x168] sm:$0xff]
      %v251 = vld [vmem:[%s1 + $0x170] sm:$0xff]
      %v252 = vld [vmem:[%s1 + $0x178] sm:$0xff]
      %v253 = vld [vmem:[%s1 + $0x180] sm:$0xff]
      %v254 = vld [vmem:[%s1 + $0x188] sm:$0xff]
      %v255 = vld [vmem:[%s1 + $0x190] sm:$0xff]
      %v256 = vld [vmem:[%s1 + $0x198] sm:$0xff]
      %v257 = vld [vmem:[%s1 + $0x1a0] sm:$0xff]
      %v258 = vld [vmem:[%s1 + $0x1a8] sm:$0xff]
      %v259 = vld [vmem:[%s1 + $0x1b0] sm:$0xff]
      %v260 = vld [vmem:[%s1 + $0x1b8] sm:$0xff]
      %v261 = vld [vmem:[%s1 + $0x1c0] sm:$0xff]
      %v262 = vld [vmem:[%s1 + $0x1c8] sm:$0xff]
      %v263 = vld [vmem:[%s1 + $0x1d0] sm:$0xff]
      %v264 = vld [vmem:[%s1 + $0x1d8] sm:$0xff]
      %v265 = vld [vmem:[%s1 + $0x1e0] sm:$0xff]
      %v266 = vld [vmem:[%s1 + $0x1e8] sm:$0xff]
      %v267 = vld [vmem:[%s1 + $0x1f0] sm:$0xff]
      %v268 = vld [vmem:[%s1 + $0x1f8] sm:$0xff]
      %v269 = vld [vmem:[%s1 + $0x200] sm:$0xff]
      %v270 = vld [vmem:[%s1 + $0x208] sm:$0xff]
      %v271 = vld [vmem:[%s1 + $0x210] sm:$0xff]
      %v272 = vld [vmem:[%s1 + $0x218] sm:$0xff]
      %v273 = vld [vmem:[%s1 + $0x220] sm:$0xff]
      %v274 = vld [vmem:[%s1 + $0x228] sm:$0xff]
      %v275 = vld [vmem:[%s1 + $0x230] sm:$0xff]
      %v276 = vld [vmem:[%s1 + $0x238] sm:$0xff]
      %v277 = vld [vmem:[%s1 + $0x240] sm:$0xff]
      %v278 = vld [vmem:[%s1 + $0x248] sm:$0xff]
      %v279 = vld [vmem:[%s1 + $0x250] sm:$0xff]
      %v280 = vld [vmem:[%s1 + $0x258] sm:$0xff]
      %v281 = vld [vmem:[%s1 + $0x260] sm:$0xff]
      %v282 = vld [vmem:[%s1 + $0x268] sm:$0xff]
      %v283 = vld [vmem:[%s1 + $0x270] sm:$0xff]
      %v284 = vld [vmem:[%s1 + $0x278] sm:$0xff]
      %v285 = vld [vmem:[%s1 + $0x280] sm:$0xff]
      %v286 = vld [vmem:[%s1 + $0x288] sm:$0xff]
      %v287 = vld [vmem:[%s1 + $0x290] sm:$0xff]
      %v288 = vld [vmem:[%s1 + $0x298] sm:$0xff]
      %v289 = vld [vmem:[%s1 + $0x2a0] sm:$0xff]
      %v290 = vld [vmem:[%s1 + $0x2a8] sm:$0xff]
      %v291 = vld [vmem:[%s1 + $0x2b0] sm:$0xff]
      %v292 = vld [vmem:[%s1 + $0x2b8] sm:$0xff]
      %v293 = vld [vmem:[%s1 + $0x2c0] sm:$0xff]
      %v294 = vld [vmem:[%s1 + $0x2c8] sm:$0xff]
      %v295 = vld [vmem:[%s1 + $0x2d0] sm:$0xff]
      %v296 = vld [vmem:[%s1 + $0x2d8] sm:$0xff]
      %v297 = vld [vmem:[%s1 + $0x2e0] sm:$0xff]
      %v298 = vld [vmem:[%s1 + $0x2e8] sm:$0xff]
      %v299 = vld [vmem:[%s1 + $0x2f0] sm:$0xff]
      %v300 = vld [vmem:[%s1 + $0x2f8] sm:$0xff]
      %v303 = vunpack.c.l.s4 1983009808
      %v304 = vunpack.c.0.s8 %v303
      %v305 = vlaneseq
      %v306 = vshrl.u32 %v305, 7
      %v307 = vsub.s32 %v304, %v306
      %v308 = vrot.slane %v204, %v307
      %v309 = vcombine.high %v308, %v308
      %v408 = vunpack.c.l.b16 %v205
      %v409 = vunpack.c.h.b16 %v205
      %v410 = vunpack.c.l.b16 %v206
      %v411 = vunpack.c.h.b16 %v206
      %v412 = vunpack.c.l.b16 %v207
      %v413 = vunpack.c.h.b16 %v207
      %v414 = vunpack.c.l.b16 %v208
      %v415 = vunpack.c.h.b16 %v208
      %v416 = vunpack.c.l.b16 %v209
      %v417 = vunpack.c.h.b16 %v209
      %v418 = vunpack.c.l.b16 %v210
      %v419 = vunpack.c.h.b16 %v210
      %v420 = vunpack.c.l.b16 %v211
      %v421 = vunpack.c.h.b16 %v211
      %v422 = vunpack.c.l.b16 %v212
      %v423 = vunpack.c.h.b16 %v212
      %v424 = vunpack.c.l.b16 %v213
      %v425 = vunpack.c.h.b16 %v213
      %v426 = vunpack.c.l.b16 %v214
      %v427 = vunpack.c.h.b16 %v214
      %v428 = vunpack.c.l.b16 %v215
      %v429 = vunpack.c.h.b16 %v215
      %v430 = vunpack.c.l.b16 %v216
      %v431 = vunpack.c.h.b16 %v216
      %v432 = vunpack.c.l.b16 %v217
      %v433 = vunpack.c.h.b16 %v217
      %v434 = vunpack.c.l.b16 %v218
      %v435 = vunpack.c.h.b16 %v218
      %v436 = vunpack.c.l.b16 %v219
      %v437 = vunpack.c.h.b16 %v219
      %v438 = vunpack.c.l.b16 %v220
      %v439 = vunpack.c.h.b16 %v220
      %v440 = vunpack.c.l.b16 %v221
      %v441 = vunpack.c.h.b16 %v221
      %v442 = vunpack.c.l.b16 %v222
      %v443 = vunpack.c.h.b16 %v222
      %v444 = vunpack.c.l.b16 %v223
      %v445 = vunpack.c.h.b16 %v223
      %v446 = vunpack.c.l.b16 %v224
      %v447 = vunpack.c.h.b16 %v224
      %v448 = vunpack.c.l.b16 %v225
      %v449 = vunpack.c.h.b16 %v225
      %v450 = vunpack.c.l.b16 %v226
      %v451 = vunpack.c.h.b16 %v226
      %v452 = vunpack.c.l.b16 %v227
      %v453 = vunpack.c.h.b16 %v227
      %v454 = vunpack.c.l.b16 %v228
      %v455 = vunpack.c.h.b16 %v228
      %v456 = vunpack.c.l.b16 %v229
      %v457 = vunpack.c.h.b16 %v229
      %v458 = vunpack.c.l.b16 %v230
      %v459 = vunpack.c.h.b16 %v230
      %v460 = vunpack.c.l.b16 %v231
      %v461 = vunpack.c.h.b16 %v231
      %v462 = vunpack.c.l.b16 %v232
      %v463 = vunpack.c.h.b16 %v232
      %v464 = vunpack.c.l.b16 %v233
      %v465 = vunpack.c.h.b16 %v233
      %v466 = vunpack.c.l.b16 %v234
      %v467 = vunpack.c.h.b16 %v234
      %v468 = vunpack.c.l.b16 %v235
      %v469 = vunpack.c.h.b16 %v235
      %v470 = vunpack.c.l.b16 %v236
      %v471 = vunpack.c.h.b16 %v236
      %v472 = vunpack.c.l.b16 %v237
      %v473 = vunpack.c.h.b16 %v237
      %v474 = vunpack.c.l.b16 %v238
      %v475 = vunpack.c.h.b16 %v238
      %v476 = vunpack.c.l.b16 %v239
      %v477 = vunpack.c.h.b16 %v239
      %v478 = vunpack.c.l.b16 %v240
      %v479 = vunpack.c.h.b16 %v240
      %v480 = vunpack.c.l.b16 %v241
      %v481 = vunpack.c.h.b16 %v241
      %v482 = vunpack.c.l.b16 %v242
      %v483 = vunpack.c.h.b16 %v242
      %v484 = vunpack.c.l.b16 %v243
      %v485 = vunpack.c.h.b16 %v243
      %v486 = vunpack.c.l.b16 %v244
      %v487 = vunpack.c.h.b16 %v244
      %v488 = vunpack.c.l.b16 %v245
      %v489 = vunpack.c.h.b16 %v245
      %v490 = vunpack.c.l.b16 %v246
      %v491 = vunpack.c.h.b16 %v246
      %v492 = vunpack.c.l.b16 %v247
      %v493 = vunpack.c.h.b16 %v247
      %v494 = vunpack.c.l.b16 %v248
      %v495 = vunpack.c.h.b16 %v248
      %v496 = vunpack.c.l.b16 %v249
      %v497 = vunpack.c.h.b16 %v249
      %v498 = vunpack.c.l.b16 %v250
      %v499 = vunpack.c.h.b16 %v250
      %v500 = vunpack.c.l.b16 %v251
      %v501 = vunpack.c.h.b16 %v251
      %v502 = vunpack.c.l.b16 %v252
      %v503 = vunpack.c.h.b16 %v252
      %v504 = vunpack.c.l.b16 %v253
      %v505 = vunpack.c.h.b16 %v253
      %v506 = vunpack.c.l.b16 %v254
      %v507 = vunpack.c.h.b16 %v254
      %v508 = vunpack.c.l.b16 %v255
      %v509 = vunpack.c.h.b16 %v255
      %v510 = vunpack.c.l.b16 %v256
      %v511 = vunpack.c.h.b16 %v256
      %v512 = vunpack.c.l.b16 %v257
      %v513 = vunpack.c.h.b16 %v257
      %v514 = vunpack.c.l.b16 %v258
      %v515 = vunpack.c.h.b16 %v258
      %v516 = vunpack.c.l.b16 %v259
      %v517 = vunpack.c.h.b16 %v259
      %v518 = vunpack.c.l.b16 %v260
      %v519 = vunpack.c.h.b16 %v260
      %v520 = vunpack.c.l.b16 %v261
      %v521 = vunpack.c.h.b16 %v261
      %v522 = vunpack.c.l.b16 %v262
      %v523 = vunpack.c.h.b16 %v262
      %v524 = vunpack.c.l.b16 %v263
      %v525 = vunpack.c.h.b16 %v263
      %v526 = vunpack.c.l.b16 %v264
      %v527 = vunpack.c.h.b16 %v264
      %v528 = vunpack.c.l.b16 %v265
      %v529 = vunpack.c.h.b16 %v265
      %v530 = vunpack.c.l.b16 %v266
      %v531 = vunpack.c.h.b16 %v266
      %v532 = vunpack.c.l.b16 %v267
      %v533 = vunpack.c.h.b16 %v267
      %v534 = vunpack.c.l.b16 %v268
      %v535 = vunpack.c.h.b16 %v268
      %v536 = vunpack.c.l.b16 %v269
      %v537 = vunpack.c.h.b16 %v269
      %v538 = vunpack.c.l.b16 %v270
      %v539 = vunpack.c.h.b16 %v270
      %v540 = vunpack.c.l.b16 %v271
      %v541 = vunpack.c.h.b16 %v271
      %v542 = vunpack.c.l.b16 %v272
      %v543 = vunpack.c.h.b16 %v272
      %v544 = vunpack.c.l.b16 %v273
      %v545 = vunpack.c.h.b16 %v273
      %v546 = vunpack.c.l.b16 %v274
      %v547 = vunpack.c.h.b16 %v274
      %v548 = vunpack.c.l.b16 %v275
      %v549 = vunpack.c.h.b16 %v275
      %v550 = vunpack.c.l.b16 %v276
      %v551 = vunpack.c.h.b16 %v276
      %v552 = vunpack.c.l.b16 %v277
      %v553 = vunpack.c.h.b16 %v277
      %v554 = vunpack.c.l.b16 %v278
      %v555 = vunpack.c.h.b16 %v278
      %v556 = vunpack.c.l.b16 %v279
      %v557 = vunpack.c.h.b16 %v279
      %v558 = vunpack.c.l.b16 %v280
      %v559 = vunpack.c.h.b16 %v280
      %v560 = vunpack.c.l.b16 %v281
      %v561 = vunpack.c.h.b16 %v281
      %v562 = vunpack.c.l.b16 %v282
      %v563 = vunpack.c.h.b16 %v282
      %v564 = vunpack.c.l.b16 %v283
      %v565 = vunpack.c.h.b16 %v283
      %v566 = vunpack.c.l.b16 %v284
      %v567 = vunpack.c.h.b16 %v284
      %v568 = vunpack.c.l.b16 %v285
      %v569 = vunpack.c.h.b16 %v285
      %v570 = vunpack.c.l.b16 %v286
      %v571 = vunpack.c.h.b16 %v286
      %v572 = vunpack.c.l.b16 %v287
      %v573 = vunpack.c.h.b16 %v287
      %v574 = vunpack.c.l.b16 %v288
      %v575 = vunpack.c.h.b16 %v288
      %v576 = vunpack.c.l.b16 %v289
      %v577 = vunpack.c.h.b16 %v289
      %v578 = vunpack.c.l.b16 %v290
      %v579 = vunpack.c.h.b16 %v290
      %v580 = vunpack.c.l.b16 %v291
      %v581 = vunpack.c.h.b16 %v291
      %v582 = vunpack.c.l.b16 %v292
      %v583 = vunpack.c.h.b16 %v292
      %v584 = vunpack.c.l.b16 %v293
      %v585 = vunpack.c.h.b16 %v293
      %v586 = vunpack.c.l.b16 %v294
      %v587 = vunpack.c.h.b16 %v294
      %v588 = vunpack.c.l.b16 %v295
      %v589 = vunpack.c.h.b16 %v295
      %v590 = vunpack.c.l.b16 %v296
      %v591 = vunpack.c.h.b16 %v296
      %v592 = vunpack.c.l.b16 %v297
      %v593 = vunpack.c.h.b16 %v297
      %v594 = vunpack.c.l.b16 %v298
      %v595 = vunpack.c.h.b16 %v298
      %v596 = vunpack.c.l.b16 %v299
      %v597 = vunpack.c.h.b16 %v299
      %v598 = vunpack.c.l.b16 %v300
      %v599 = vunpack.c.h.b16 %v300
      %v600 = vpack.c.b16 %v414, %v408
      %v601 = vpack.c.b16 %v415, %v409
      %v602 = vpack.c.b16 %v416, %v410
      %v603 = vpack.c.b16 %v417, %v411
      %v604 = vpack.c.b16 %v418, %v412
      %v605 = vpack.c.b16 %v419, %v413
      %v606 = vpack.c.b16 %v426, %v420
      %v607 = vpack.c.b16 %v427, %v421
      %v608 = vpack.c.b16 %v428, %v422
      %v609 = vpack.c.b16 %v429, %v423
      %v610 = vpack.c.b16 %v430, %v424
      %v611 = vpack.c.b16 %v431, %v425
      %v612 = vpack.c.b16 %v438, %v432
      %v613 = vpack.c.b16 %v439, %v433
      %v614 = vpack.c.b16 %v440, %v434
      %v615 = vpack.c.b16 %v441, %v435
      %v616 = vpack.c.b16 %v442, %v436
      %v617 = vpack.c.b16 %v443, %v437
      %v618 = vpack.c.b16 %v450, %v444
      %v619 = vpack.c.b16 %v451, %v445
      %v620 = vpack.c.b16 %v452, %v446
      %v621 = vpack.c.b16 %v453, %v447
      %v622 = vpack.c.b16 %v454, %v448
      %v623 = vpack.c.b16 %v455, %v449
      %v624 = vpack.c.b16 %v462, %v456
      %v625 = vpack.c.b16 %v463, %v457
      %v626 = vpack.c.b16 %v464, %v458
      %v627 = vpack.c.b16 %v465, %v459
      %v628 = vpack.c.b16 %v466, %v460
      %v629 = vpack.c.b16 %v467, %v461
      %v630 = vpack.c.b16 %v474, %v468
      %v631 = vpack.c.b16 %v475, %v469
      %v632 = vpack.c.b16 %v476, %v470
      %v633 = vpack.c.b16 %v477, %v471
      %v634 = vpack.c.b16 %v478, %v472
      %v635 = vpack.c.b16 %v479, %v473
      %v636 = vpack.c.b16 %v486, %v480
      %v637 = vpack.c.b16 %v487, %v481
      %v638 = vpack.c.b16 %v488, %v482
      %v639 = vpack.c.b16 %v489, %v483
      %v640 = vpack.c.b16 %v490, %v484
      %v641 = vpack.c.b16 %v491, %v485
      %v642 = vpack.c.b16 %v498, %v492
      %v643 = vpack.c.b16 %v499, %v493
      %v644 = vpack.c.b16 %v500, %v494
      %v645 = vpack.c.b16 %v501, %v495
      %v646 = vpack.c.b16 %v502, %v496
      %v647 = vpack.c.b16 %v503, %v497
      %v648 = vpack.c.b16 %v510, %v504
      %v649 = vpack.c.b16 %v511, %v505
      %v650 = vpack.c.b16 %v512, %v506
      %v651 = vpack.c.b16 %v513, %v507
      %v652 = vpack.c.b16 %v514, %v508
      %v653 = vpack.c.b16 %v515, %v509
      %v654 = vpack.c.b16 %v522, %v516
      %v655 = vpack.c.b16 %v523, %v517
      %v656 = vpack.c.b16 %v524, %v518
      %v657 = vpack.c.b16 %v525, %v519
      %v658 = vpack.c.b16 %v526, %v520
      %v659 = vpack.c.b16 %v527, %v521
      %v660 = vpack.c.b16 %v534, %v528
      %v661 = vpack.c.b16 %v535, %v529
      %v662 = vpack.c.b16 %v536, %v530
      %v663 = vpack.c.b16 %v537, %v531
      %v664 = vpack.c.b16 %v538, %v532
      %v665 = vpack.c.b16 %v539, %v533
      %v666 = vpack.c.b16 %v546, %v540
      %v667 = vpack.c.b16 %v547, %v541
      %v668 = vpack.c.b16 %v548, %v542
      %v669 = vpack.c.b16 %v549, %v543
      %v670 = vpack.c.b16 %v550, %v544
      %v671 = vpack.c.b16 %v551, %v545
      %v672 = vpack.c.b16 %v558, %v552
      %v673 = vpack.c.b16 %v559, %v553
      %v674 = vpack.c.b16 %v560, %v554
      %v675 = vpack.c.b16 %v561, %v555
      %v676 = vpack.c.b16 %v562, %v556
      %v677 = vpack.c.b16 %v563, %v557
      %v678 = vpack.c.b16 %v570, %v564
      %v679 = vpack.c.b16 %v571, %v565
      %v680 = vpack.c.b16 %v572, %v566
      %v681 = vpack.c.b16 %v573, %v567
      %v682 = vpack.c.b16 %v574, %v568
      %v683 = vpack.c.b16 %v575, %v569
      %v684 = vpack.c.b16 %v582, %v576
      %v685 = vpack.c.b16 %v583, %v577
      %v686 = vpack.c.b16 %v584, %v578
      %v687 = vpack.c.b16 %v585, %v579
      %v688 = vpack.c.b16 %v586, %v580
      %v689 = vpack.c.b16 %v587, %v581
      %v690 = vpack.c.b16 %v594, %v588
      %v691 = vpack.c.b16 %v595, %v589
      %v692 = vpack.c.b16 %v596, %v590
      %v693 = vpack.c.b16 %v597, %v591
      %v694 = vpack.c.b16 %v598, %v592
      %v695 = vpack.c.b16 %v599, %v593
      %792 = vmatprep.subr.bf16.mxu0 %v601
      %793 = vmatpush1.bf16.msra.mxu0 %v600
      %794 = vmatprep.subr.bf16.mxu0 %v607
      %795 = vmatpush1.bf16.msra.mxu0 %v606
      %796 = vmatprep.subr.bf16.mxu0 %v613
      %797 = vmatpush1.bf16.msra.mxu0 %v612
      %798 = vmatprep.subr.bf16.mxu0 %v619
      %799 = vmatpush1.bf16.msra.mxu0 %v618
      %800 = vmatprep.subr.bf16.mxu0 %v625
      %801 = vmatpush1.bf16.msra.mxu0 %v624
      %802 = vmatprep.subr.bf16.mxu0 %v631
      %803 = vmatpush1.bf16.msra.mxu0 %v630
      %804 = vmatprep.subr.bf16.mxu0 %v637
      %805 = vmatpush1.bf16.msra.mxu0 %v636
      %806 = vmatprep.subr.bf16.mxu0 %v643
      %807 = vmatpush1.bf16.msra.mxu0 %v642
      %808 = vmatprep.subr.bf16.mxu0 %v649
      %809 = vmatpush1.bf16.msra.mxu0 %v648
      %810 = vmatprep.subr.bf16.mxu0 %v655
      %811 = vmatpush1.bf16.msra.mxu0 %v654
      %812 = vmatprep.subr.bf16.mxu0 %v661
      %813 = vmatpush1.bf16.msra.mxu0 %v660
      %814 = vmatprep.subr.bf16.mxu0 %v667
      %815 = vmatpush1.bf16.msra.mxu0 %v666
      %816 = vmatprep.subr.bf16.mxu0 %v673
      %817 = vmatpush1.bf16.msra.mxu0 %v672
      %818 = vmatprep.subr.bf16.mxu0 %v679
      %819 = vmatpush1.bf16.msra.mxu0 %v678
      %820 = vmatprep.subr.bf16.mxu0 %v685
      %821 = vmatpush1.bf16.msra.mxu0 %v684
      %822 = vmatprep.subr.bf16.mxu0 %v691
      %823 = vmatpush1.bf16.msra.mxu0 %v690
      %824 = vmatprep.mubr.bf16.mxu0 %v309
      %825 = vmatmul.mubr.bf16.gmra.mrb[0].mxu0 %v308
      %v826 = vpop.f32.mrb[0].mxu0
      %v827 = vadd.f32 0.0, %v826
      %v828 = vpop.f32.mrb[0].mxu0
      %v829 = vadd.f32 0.0, %v828
      %v830 = vpop.f32.mrb[0].mxu0
      %v831 = vpop.f32.mrb[0].mxu0
      %832 = vdwg.mxu0
      %833 = vmatprep.subr.bf16.mxu0 %v603
      %834 = vmatpush1.bf16.msra.mxu0 %v602
      %835 = vmatprep.subr.bf16.mxu0 %v609
      %836 = vmatpush1.bf16.msra.mxu0 %v608
      %837 = vmatprep.subr.bf16.mxu0 %v615
      %838 = vmatpush1.bf16.msra.mxu0 %v614
      %839 = vmatprep.subr.bf16.mxu0 %v621
      %840 = vmatpush1.bf16.msra.mxu0 %v620
      %841 = vmatprep.subr.bf16.mxu0 %v627
      %842 = vmatpush1.bf16.msra.mxu0 %v626
      %843 = vmatprep.subr.bf16.mxu0 %v633
      %844 = vmatpush1.bf16.msra.mxu0 %v632
      %845 = vmatprep.subr.bf16.mxu0 %v639
      %846 = vmatpush1.bf16.msra.mxu0 %v638
      %847 = vmatprep.subr.bf16.mxu0 %v645
      %848 = vmatpush1.bf16.msra.mxu0 %v644
      %849 = vmatprep.subr.bf16.mxu0 %v651
      %850 = vmatpush1.bf16.msra.mxu0 %v650
      %851 = vmatprep.subr.bf16.mxu0 %v657
      %852 = vmatpush1.bf16.msra.mxu0 %v656
      %853 = vmatprep.subr.bf16.mxu0 %v663
      %854 = vmatpush1.bf16.msra.mxu0 %v662
      %855 = vmatprep.subr.bf16.mxu0 %v669
      %856 = vmatpush1.bf16.msra.mxu0 %v668
      %857 = vmatprep.subr.bf16.mxu0 %v675
      %858 = vmatpush1.bf16.msra.mxu0 %v674
      %859 = vmatprep.subr.bf16.mxu0 %v681
      %860 = vmatpush1.bf16.msra.mxu0 %v680
      %861 = vmatprep.subr.bf16.mxu0 %v687
      %862 = vmatpush1.bf16.msra.mxu0 %v686
      %863 = vmatprep.subr.bf16.mxu0 %v693
      %864 = vmatpush1.bf16.msra.mxu0 %v692
      %865 = vmatprep.mubr.bf16.mxu0 %v309
      %866 = vmatmul.mubr.bf16.gmra.mrb[0].mxu0 %v308
      %v867 = vpop.f32.mrb[0].mxu0
      %v868 = vadd.f32 0.0, %v867
      %v869 = vpop.f32.mrb[0].mxu0
      %v870 = vadd.f32 0.0, %v869
      %v871 = vpop.f32.mrb[0].mxu0
      %v872 = vpop.f32.mrb[0].mxu0
      %873 = vdwg.mxu0
      %874 = vmatprep.subr.bf16.mxu0 %v605
      %875 = vmatpush1.bf16.msra.mxu0 %v604
      %876 = vmatprep.subr.bf16.mxu0 %v611
      %877 = vmatpush1.bf16.msra.mxu0 %v610
      %878 = vmatprep.subr.bf16.mxu0 %v617
      %879 = vmatpush1.bf16.msra.mxu0 %v616
      %880 = vmatprep.subr.bf16.mxu0 %v623
      %881 = vmatpush1.bf16.msra.mxu0 %v622
      %882 = vmatprep.subr.bf16.mxu0 %v629
      %883 = vmatpush1.bf16.msra.mxu0 %v628
      %884 = vmatprep.subr.bf16.mxu0 %v635
      %885 = vmatpush1.bf16.msra.mxu0 %v634
      %886 = vmatprep.subr.bf16.mxu0 %v641
      %887 = vmatpush1.bf16.msra.mxu0 %v640
      %888 = vmatprep.subr.bf16.mxu0 %v647
      %889 = vmatpush1.bf16.msra.mxu0 %v646
      %890 = vmatprep.subr.bf16.mxu0 %v653
      %891 = vmatpush1.bf16.msra.mxu0 %v652
      %892 = vmatprep.subr.bf16.mxu0 %v659
      %893 = vmatpush1.bf16.msra.mxu0 %v658
      %894 = vmatprep.subr.bf16.mxu0 %v665
      %895 = vmatpush1.bf16.msra.mxu0 %v664
      %896 = vmatprep.subr.bf16.mxu0 %v671
      %897 = vmatpush1.bf16.msra.mxu0 %v670
      %898 = vmatprep.subr.bf16.mxu0 %v677
      %899 = vmatpush1.bf16.msra.mxu0 %v676
      %900 = vmatprep.subr.bf16.mxu0 %v683
      %901 = vmatpush1.bf16.msra.mxu0 %v682
      %902 = vmatprep.subr.bf16.mxu0 %v689
      %903 = vmatpush1.bf16.msra.mxu0 %v688
      %904 = vmatprep.subr.bf16.mxu0 %v695
      %905 = vmatpush1.bf16.msra.mxu0 %v694
      %906 = vmatprep.mubr.bf16.mxu0 %v309
      %907 = vmatmul.mubr.bf16.gmra.mrb[0].mxu0 %v308
      %v908 = vpop.f32.mrb[0].mxu0
      %v909 = vadd.f32 0.0, %v908
      %v910 = vpop.f32.mrb[0].mxu0
      %v911 = vadd.f32 0.0, %v910
      %v912 = vpop.f32.mrb[0].mxu0
      %v913 = vpop.f32.mrb[0].mxu0
      %914 = vdwg.mxu0
      %v915 = vld [vmem:[#allocation2] sm:$0x3f]
      %vm916 = vcmask 1043456
      %v917 = vsel %vm916, %v827, 0.0
      %v918 = vrot.slane %v917, 4
      %v919 = vadd.f32 %v917, %v918
      %v920 = vrot.slane %v919, 2
      %v921 = vadd.f32 %v919, %v920
      %v922 = vrot.slane %v921, 1
      %v923 = vadd.f32 %v921, %v922
      %v924 = vsel %vm916, %v829, 0.0
      %v925 = vrot.slane %v924, 4
      %v926 = vadd.f32 %v924, %v925
      %v927 = vrot.slane %v926, 2
      %v928 = vadd.f32 %v926, %v927
      %v929 = vrot.slane %v928, 1
      %v930 = vadd.f32 %v928, %v929
      %v931 = vsel %vm916, %v868, 0.0
      %v932 = vrot.slane %v931, 4
      %v933 = vadd.f32 %v931, %v932
      %v934 = vrot.slane %v933, 2
      %v935 = vadd.f32 %v933, %v934
      %v936 = vrot.slane %v935, 1
      %v937 = vadd.f32 %v935, %v936
      %v938 = vsel %vm916, %v870, 0.0
      %v939 = vrot.slane %v938, 4
      %v940 = vadd.f32 %v938, %v939
      %v941 = vrot.slane %v940, 2
      %v942 = vadd.f32 %v940, %v941
      %v943 = vrot.slane %v942, 1
      %v944 = vadd.f32 %v942, %v943
      %v945 = vsel %vm916, %v909, 0.0
      %v946 = vrot.slane %v945, 4
      %v947 = vadd.f32 %v945, %v946
      %v948 = vrot.slane %v947, 2
      %v949 = vadd.f32 %v947, %v948
      %v950 = vrot.slane %v949, 1
      %v951 = vadd.f32 %v949, %v950
      %v952 = vsel %vm916, %v911, 0.0
      %v953 = vrot.slane %v952, 4
      %v954 = vadd.f32 %v952, %v953
      %v955 = vrot.slane %v954, 2
      %v956 = vadd.f32 %v954, %v955
      %v957 = vrot.slane %v956, 1
      %v958 = vadd.f32 %v956, %v957
      %v965 = vcombine.low %v923, %v930
      %v966 = vcombine.low %v937, %v944
      %v967 = vcombine.low %v951, %v958
      %v969 = vunpack.c.l.s4 1966171168
      %v970 = vunpack.c.0.s8 %v969
      %v971 = vlaneseq
      %v972 = vshrl.u32 %v971, 7
      %v973 = vsub.s32 %v970, %v972
      %v974 = vrot.slane %v965, %v973
      %v976 = vunpack.c.l.s4 1966171168
      %v977 = vunpack.c.0.s8 %v976
      %v978 = vlaneseq
      %v979 = vshrl.u32 %v978, 7
      %v980 = vsub.s32 %v977, %v979
      %v981 = vrot.slane %v966, %v980
      %v983 = vunpack.c.l.s4 1966171168
      %v984 = vunpack.c.0.s8 %v983
      %v985 = vlaneseq
      %v986 = vshrl.u32 %v985, 7
      %v987 = vsub.s32 %v984, %v986
      %v988 = vrot.slane %v967, %v987
      %v989 = vcombine.low %v974, %v981
      %v991 = vunpack.c.l.s4 1966171168
      %v992 = vunpack.c.0.s8 %v991
      %v993 = vlaneseq
      %v994 = vshrl.u32 %v993, 7
      %v995 = vsub.s32 %v992, %v994
      %v996 = vrot.slane %v989, %v995
      %v998 = vunpack.c.l.s4 1966171168
      %v999 = vunpack.c.0.s8 %v998
      %v1000 = vlaneseq
      %v1001 = vshrl.u32 %v1000, 7
      %v1002 = vsub.s32 %v999, %v1001
      %v1003 = vrot.slane %v988, %v1002
      %v1004 = vcombine.low %v996, %v1003
      %v1006 = vadd.f32 %v915, %v1004
      %v1007 = vlaneseq
      %vm1008 = vcmp.ge.s32.totalorder %v1007, 0
      %vm1009 = vcmp.lt.s32.totalorder %v1007, 768
      %vm1010 = vmand %vm1008, %vm1009
      %1011 = vst.msk [vmem:[#allocation2] sm:$0x3f] %vm1010, %v1006
      // Predicated region
      $region37: #{clip_baseline_forward.2} parent=31 // pred_check
        %p1012 = pneg %p195
      $region38: #{clip_baseline_forward.2} parent=31 // pred_check_branch
        %1014 = sbr.rel (%p1012) target = $region40
      $region39: #{clip_baseline_forward.2} parent=31 // pred_region
        %v1015 = vld [vmem:[#allocation2] sm:$0x3f]
        %v1016 = vmul.f32 %v1015, 0.25
        %v1017 = vld [vmem:[%s2] sm:$0x3f]
        %v1018 = vadd.f32 %v1016, %v1017
        %1019 = vst.msk [vmem:[%s194] sm:$0x3f] %vm1010, %v1018
      $region40: #{clip_baseline_forward.2} parent=31 // pred_fallthru
        _
      %p1020 = scmp.lt.s32.totalorder %s18, 1
      %s1021 = scalar_select %p1020, %s18, 1
      %s1022 = smul.addr %s1021, 6
      %s1023 = scalar_lea.vmem %s3, %s1022
      // Predicated region
      $region41: #{clip_baseline_forward.2} parent=31 // pred_check
        %p1024 = pneg %p114
      $region42: #{clip_baseline_forward.2} parent=31 // pred_check_branch
        %1026 = sbr.rel (%p1024) target = $region44
      $region43: #{clip_baseline_forward.2} parent=31 // pred_region
        _
      $region44: #{clip_baseline_forward.2} parent=31 // pred_fallthru
        _
    $region32: #{clip_baseline_forward.2} parent=5 // pred_fallthru
      _
    %p1027 = scmp.le.s32.totalorder 2, %s9
    // Predicated region
    $region45: #{clip_baseline_forward.2} parent=5 // pred_check
      %p1028 = pneg %p1027
    $region46: #{clip_baseline_forward.2} parent=5 // pred_check_branch
      %1030 = sbr.rel (%p1028) target = $region48
    $region47: #{clip_baseline_forward.2} parent=5 // pred_region
      %s1031 = ssub.s32 %s9, 2
      // Predicated region
      $region49: #{clip_baseline_forward.2} parent=47 // pred_check
        %p1032 = pneg %p120
      $region50: #{clip_baseline_forward.2} parent=47 // pred_check_branch
        %1034 = sbr.rel (%p1032) target = $region52
      $region51: #{clip_baseline_forward.2} parent=47 // pred_region
        %p1035 = scmp.lt.s32.totalorder %s20, 1
        %s1036 = scalar_select %p1035, %s20, 1
        %s1037 = smul.addr %s1036, 6
        %s1038 = scalar_lea.vmem %s3, %s1037
      $region52: #{clip_baseline_forward.2} parent=47 // pred_fallthru
        _
    $region48: #{clip_baseline_forward.2} parent=5 // pred_fallthru
      _
  $region6: #{clip_baseline_forward.2} parent=0 // loop_footer
    %s13 = sadd.s32 1, %s9
  $region7: #{clip_baseline_forward.2} parent=0 // loop_footer_branch
    %8 = sbr.rel target = $region3
  $region8: #{clip_baseline_forward.2} parent=0 // loop_exit
    _

</llo_original>
